<compile_context>
chip_gen: v7x
topology: tpu7x:2x2x1
jax: 0.10.0
libtpu: 0.0.40
codegen_flags: <defaults>
</compile_context>

<pallas_src>
import functools

import jax
import jax.numpy as jnp
from jax.experimental import pallas as pl
from jax.experimental.pallas import tpu as pltpu

WT = True  # src already carries embedding_dim on its last axis (no unsqueeze)


def _sigmoid(x):
    # Exact identity sigmoid(x) = 0.5*tanh(0.5x)+0.5 : single EUP op.
    return 0.5 * jnp.tanh(0.5 * x) + 0.5


# ----------------------------------------------------------------------------
# Fused multi-layer LSTM kernel.
# refs: gx0, whh0, wcat[1..L-1], b[1..L-1], state_out
#   gx0    : (TT, Bp, 4H)  layer-0 input gates (x @ W_ih0 + b0), hoisted
#   whh0   : (H, 4H)
#   wcat_l : (2H, 4H)      [W_ih_l ; W_hh_l] stacked (layers >= 1 only)
#   b_l    : (1, 4H)       (layers >= 1 only)
#   state  : (Bp, 2*L*H)   resident VMEM accumulator, lanes = [h0..h_{L-1}, c0..c_{L-1}]
# ----------------------------------------------------------------------------
def _fused_lstm_kernel(*refs, n_layers, hidden_dim, tt, seq_len, mask_tail):
    L = n_layers
    H = hidden_dim

    idx = 0
    gx0_ref = refs[idx]; idx += 1
    whh0_ref = refs[idx]; idx += 1
    wcat_refs = refs[idx:idx + (L - 1)]; idx += (L - 1)
    b_refs = refs[idx:idx + (L - 1)]; idx += (L - 1)
    state_ref = refs[idx]; idx += 1

    Bp = gx0_ref.shape[1]
    pid = pl.program_id(0)

    @pl.when(pid == 0)
    def _():
        state_ref[...] = jnp.zeros_like(state_ref)

    # Read resident state ONCE per grid step; keep it in the loop carry.
    state0 = state_ref[...]                                       # (Bp, 2LH)
    h_init = tuple(state0[:, l * H:(l + 1) * H] for l in range(L))
    c_init = tuple(state0[:, (L + l) * H:(L + l + 1) * H] for l in range(L))

    # Hoist weight loads and bias broadcasts out of the (unrolled) time loop.
    # TODO(synk): for large H on v6e/v7x, cast the matmul operands (weights + h)
    # to bf16 with preferred_element_type=f32; kept f32 here for parity at H=32.
    whh0 = whh0_ref[...]
    wcats = tuple(w[...] for w in wcat_refs)
    biases = tuple(jnp.broadcast_to(b_refs[l][...], (Bp, 4 * H))
                   for l in range(L - 1))

    def step(i, carry):
        hs, cs = carry
        x_gates = gx0_ref[i]                                      # (Bp, 4H)
        new_hs = []
        new_cs = []
        h_below = None
        for l in range(L):
            h = hs[l]
            c = cs[l]
            if l == 0:
                gates = x_gates + jnp.dot(
                    h, whh0, preferred_element_type=jnp.float32)
            else:
                hin = jnp.concatenate([h_below, h], axis=-1)      # (Bp, 2H)
                gates = jnp.dot(hin, wcats[l - 1],
                                preferred_element_type=jnp.float32) + biases[l - 1]

            # Full-vreg nonlinearities (2 EUP pushes), then slice.
            # PyTorch gate order along lanes: [i, f, g, o]
            sig_all = _sigmoid(gates)                             # (Bp, 4H)
            tanh_all = jnp.tanh(gates)                            # (Bp, 4H)
            i_g = sig_all[:, 0 * H:1 * H]
            f_g = sig_all[:, 1 * H:2 * H]
            o_g = sig_all[:, 3 * H:4 * H]
            g_g = tanh_all[:, 2 * H:3 * H]

            c_new = f_g * c + i_g * g_g
            h_new = o_g * jnp.tanh(c_new)

            if mask_tail:
                valid = (pid * tt + i) < seq_len
                h_new = jnp.where(valid, h_new, h)
                c_new = jnp.where(valid, c_new, c)

            new_hs.append(h_new)
            new_cs.append(c_new)
            h_below = h_new
        return (tuple(new_hs), tuple(new_cs))

    hs, cs = jax.lax.fori_loop(0, tt, step, (h_init, c_init),
                               unroll=min(tt, 8))

    # Single lane-dense write-back per grid step.
    state_ref[...] = jnp.concatenate(list(hs) + list(cs), axis=-1)


# ----------------------------------------------------------------------------
# Encoder: parameters + forward
# ----------------------------------------------------------------------------
def init_encoder_params(key, input_dim, embedding_dim, hidden_dim, n_layers):
    params = {"layers": []}
    bound = 1.0 / jnp.sqrt(jnp.asarray(hidden_dim, jnp.float32))
    for layer in range(n_layers):
        d_in = embedding_dim if layer == 0 else hidden_dim
        key, k1, k2, k3, k4 = jax.random.split(key, 5)
        w_ih = jax.random.uniform(k1, (4 * hidden_dim, d_in), jnp.float32,
                                  -bound, bound)
        w_hh = jax.random.uniform(k2, (4 * hidden_dim, hidden_dim), jnp.float32,
                                  -bound, bound)
        b_ih = jax.random.uniform(k3, (4 * hidden_dim,), jnp.float32,
                                  -bound, bound)
        b_hh = jax.random.uniform(k4, (4 * hidden_dim,), jnp.float32,
                                  -bound, bound)
        params["layers"].append({
            "w_ih": w_ih.T,                       # (d_in, 4H)
            "w_hh": w_hh.T,                       # (H, 4H)
            "bias": (b_ih + b_hh)[None, :],       # (1, 4H)
        })
    # embedding Linear / dropout exist in __init__ but are unused in forward.
    key, ke, kb = jax.random.split(key, 3)
    eb = 1.0 / jnp.sqrt(jnp.asarray(input_dim, jnp.float32))
    params["embedding_w"] = jax.random.uniform(ke, (embedding_dim, input_dim),
                                               jnp.float32, -eb, eb)
    params["embedding_b"] = jax.random.uniform(kb, (embedding_dim,),
                                               jnp.float32, -eb, eb)
    return params


def encoder_forward(params, src):
    """src: (T, B, E) when WT=True. Returns (hidden, cell), each (L, B, H)."""
    if not WT:
        src = src[..., None]
    x = src.astype(jnp.float32)
    T, B, _ = x.shape
    layers = params["layers"]
    L = len(layers)
    H = layers[0]["w_hh"].shape[0]
    assert T >= 1

    # Pad batch to the f32 sublane granule (8) — padded rows are sliced off.
    Bp = max(8, ((B + 7) // 8) * 8)
    if Bp != B:
        x = jnp.pad(x, ((0, 0), (0, Bp - B), (0, 0)))

    # Hoist the layer-0 input projection out of the recurrence: one large
    # matmul over T*Bp rows, bias folded in.  (T, Bp, 4H), lane-dense.
    gx0 = (jnp.einsum('tbe,eg->tbg', x, layers[0]["w_ih"])
           + layers[0]["bias"]).astype(jnp.float32)

    # Time blocking: large TT, pad T to a multiple and mask the tail
    # (no more TT=1 fallback for awkward T).
    TT = min(T, 128)
    T_pad = ((T + TT - 1) // TT) * TT
    mask_tail = (T_pad != T)
    if mask_tail:
        gx0 = jnp.pad(gx0, ((0, T_pad - T), (0, 0), (0, 0)))
    grid = (T_pad // TT,)

    in_arrays = [gx0, layers[0]["w_hh"]]
    in_specs = [pl.BlockSpec((TT, Bp, 4 * H), lambda t: (t, 0, 0)),
                pl.BlockSpec((H, 4 * H), lambda t: (0, 0))]
    # Fused [W_ih ; W_hh] weights for layers >= 1.
    for l in range(1, L):
        wcat = jnp.concatenate([layers[l]["w_ih"], layers[l]["w_hh"]], axis=0)
        in_arrays.append(wcat)                                    # (2H, 4H)
        in_specs.append(pl.BlockSpec((2 * H, 4 * H), lambda t: (0, 0)))
    for l in range(1, L):
        in_arrays.append(layers[l]["bias"])                       # (1, 4H)
        in_specs.append(pl.BlockSpec((1, 4 * H), lambda t: (0, 0)))

    # Packed lane-dense state output: lanes = [h0..h_{L-1}, c0..c_{L-1}].
    out_shape = jax.ShapeDtypeStruct((Bp, 2 * L * H), jnp.float32)
    out_spec = pl.BlockSpec((Bp, 2 * L * H), lambda t: (0, 0))

    kernel = functools.partial(_fused_lstm_kernel, n_layers=L, hidden_dim=H,
                               tt=TT, seq_len=T, mask_tail=mask_tail)

    state = pl.pallas_call(
        kernel,
        out_shape=out_shape,
        grid_spec=pltpu.PrefetchScalarGridSpec(
            num_scalar_prefetch=0,
            grid=grid,
            in_specs=in_specs,
            out_specs=out_spec,
        ),
        compiler_params=pltpu.CompilerParams(
            dimension_semantics=("arbitrary",),       # sequential recurrence
            vmem_limit_bytes=32 * 1024 * 1024,        # safe on v5e/v6e/v7x
        ),
    )(*in_arrays)

    # TODO(synk): on v7x with large batch, add a leading "parallel" batch-block
    # grid axis so the second TensorCore is used; pointless at B=2.
    hidden = state[:, :L * H].reshape(Bp, L, H).transpose(1, 0, 2)[:, :B]
    cell = state[:, L * H:].reshape(Bp, L, H).transpose(1, 0, 2)[:, :B]
    return hidden, cell


# ----------------------------------------------------------------------------
# Pure-JAX reference (lax.scan) for a sanity check
# ----------------------------------------------------------------------------
def encoder_reference(params, src):
    if not WT:
        src = src[..., None]
    x = src.astype(jnp.float32)
    hiddens, cells = [], []
    for lp in params["layers"]:
        H = lp["w_hh"].shape[0]
        B = x.shape[1]

        def step(carry, xt, lp=lp, H=H):
            h, c = carry
            gates = xt @ lp["w_ih"] + h @ lp["w_hh"] + lp["bias"]
            i = jax.nn.sigmoid(gates[:, 0 * H:1 * H])
            f = jax.nn.sigmoid(gates[:, 1 * H:2 * H])
            g = jnp.tanh(gates[:, 2 * H:3 * H])
            o = jax.nn.sigmoid(gates[:, 3 * H:4 * H])
            c_new = f * c + i * g
            h_new = o * jnp.tanh(c_new)
            return (h_new, c_new), h_new

        init = (jnp.zeros((B, H), jnp.float32), jnp.zeros((B, H), jnp.float32))
        (h_T, c_T), outs = jax.lax.scan(step, init, x)
        x = outs
        hiddens.append(h_T)
        cells.append(c_T)
    return jnp.stack(hiddens, axis=0), jnp.stack(cells, axis=0)


if __name__ == "__main__":
    # small shapes consistent with the module
    input_dim, embedding_dim, hidden_dim, n_layers = 4, 8, 32, 2
    seq_len, batch = 8, 2

    key = jax.random.PRNGKey(0)
    key, pkey, xkey = jax.random.split(key, 3)
    params = init_encoder_params(pkey, input_dim, embedding_dim,
                                 hidden_dim, n_layers)
    src = jax.random.normal(xkey, (seq_len, batch, embedding_dim), jnp.float32)

    hidden, cell = encoder_forward(params, src)
    hidden, cell = jax.block_until_ready((hidden, cell))

    h_ref, c_ref = encoder_reference(params, src)
    assert hidden.shape == (n_layers, batch, hidden_dim)
    assert cell.shape == (n_layers, batch, hidden_dim)
    assert jnp.allclose(hidden, h_ref, atol=3e-5, rtol=1e-4)
    assert jnp.allclose(cell, c_ref, atol=3e-5, rtol=1e-4)

    # Second check: long, non-multiple-of-128 T and non-multiple-of-8 batch to
    # exercise the tail-masking and batch-padding paths.
    key, xkey2 = jax.random.split(key)
    src2 = jax.random.normal(xkey2, (133, 3, embedding_dim), jnp.float32)
    h2, c2 = jax.block_until_ready(encoder_forward(params, src2))
    h2_ref, c2_ref = encoder_reference(params, src2)
    assert jnp.allclose(h2, h2_ref, atol=1e-4, rtol=1e-3)
    assert jnp.allclose(c2, c2_ref, atol=1e-4, rtol=1e-3)

    print("KERNEL_OK")
</pallas_src>

<mosaic_0001>
module attributes {stable_mosaic.version = 11 : i64} {
  func.func @_fused_lstm_kernel(%arg0: i32, %arg1: memref<8x8x128xf32, #tpu.memory_space<vmem>>, %arg2: memref<32x128xf32, #tpu.memory_space<vmem>>, %arg3: memref<64x128xf32, #tpu.memory_space<vmem>>, %arg4: memref<1x128xf32, #tpu.memory_space<vmem>>, %arg5: memref<8x128xf32, #tpu.memory_space<vmem>>) attributes {dimension_semantics = [#tpu.dimension_semantics<arbitrary>], iteration_bounds = array<i64: 1>, scalar_prefetch = 0 : i64, scratch_operands = 0 : i64, tpu.core_type = #tpu.core_type<tc>, window_params = [{transform_indices = @transform_0, window_bounds = array<i64: 8, 8, 128>}, {pipeline_mode = #tpu.pipeline_mode<synchronous>, transform_indices = @transform_1, window_bounds = array<i64: 32, 128>}, {pipeline_mode = #tpu.pipeline_mode<synchronous>, transform_indices = @transform_2, window_bounds = array<i64: 64, 128>}, {pipeline_mode = #tpu.pipeline_mode<synchronous>, transform_indices = @transform_3, window_bounds = array<i64: 1, 128>}, {pipeline_mode = #tpu.pipeline_mode<synchronous>, transform_indices = @transform_4, window_bounds = array<i64: 8, 128>}]} {
    %c0_i32 = arith.constant 0 : i32
    %0 = arith.cmpi eq, %arg0, %c0_i32 : i32
    %1 = arith.extui %0 : i1 to i32
    %c0_i32_0 = arith.constant 0 : i32
    %2 = arith.cmpi ne, %1, %c0_i32_0 : i32
    scf.if %2 {
      %cst_90 = arith.constant 0.000000e+00 : f32
      %351 = vector.broadcast %cst_90 : f32 to vector<8x128xf32>
      %c0_91 = arith.constant 0 : index
      %c0_92 = arith.constant 0 : index
      %352 = vector.load %arg5[%c0_91, %c0_92] : memref<8x128xf32, #tpu.memory_space<vmem>>, vector<8x128xf32>
      tpu.vector_store %arg5[%c0_91, %c0_92], %351 {strides = array<i32>} : memref<8x128xf32, #tpu.memory_space<vmem>>, vector<8x128xf32>,
    } else {
    }
    %c0 = arith.constant 0 : index
    %c0_1 = arith.constant 0 : index
    %3 = vector.load %arg5[%c0, %c0_1] : memref<8x128xf32, #tpu.memory_space<vmem>>, vector<8x128xf32>
    %4 = vector.extract_strided_slice %3 {offsets = [0, 0], sizes = [8, 32], strides = [1, 1]} : vector<8x128xf32> to vector<8x32xf32>
    %5 = vector.extract_strided_slice %3 {offsets = [0, 32], sizes = [8, 32], strides = [1, 1]} : vector<8x128xf32> to vector<8x32xf32>
    %6 = vector.extract_strided_slice %3 {offsets = [0, 64], sizes = [8, 32], strides = [1, 1]} : vector<8x128xf32> to vector<8x32xf32>
    %7 = vector.extract_strided_slice %3 {offsets = [0, 96], sizes = [8, 32], strides = [1, 1]} : vector<8x128xf32> to vector<8x32xf32>
    %c0_2 = arith.constant 0 : index
    %c0_3 = arith.constant 0 : index
    %8 = vector.load %arg2[%c0_2, %c0_3] : memref<32x128xf32, #tpu.memory_space<vmem>>, vector<32x128xf32>
    %c0_4 = arith.constant 0 : index
    %c0_5 = arith.constant 0 : index
    %9 = vector.load %arg3[%c0_4, %c0_5] : memref<64x128xf32, #tpu.memory_space<vmem>>, vector<64x128xf32>
    %c0_6 = arith.constant 0 : index
    %c0_7 = arith.constant 0 : index
    %10 = vector.load %arg4[%c0_6, %c0_7] : memref<1x128xf32, #tpu.memory_space<vmem>>, vector<1x128xf32>
    %11 = vector.shape_cast %10 : vector<1x128xf32> to vector<1x128xf32>
    %12 = vector.broadcast %11 : vector<1x128xf32> to vector<8x128xf32>
    %c0_i32_8 = arith.constant 0 : i32
    %13 = arith.index_cast %c0_i32_8 : i32 to index
    %c0_9 = arith.constant 0 : index
    %c0_10 = arith.constant 0 : index
    %14 = vector.load %arg1[%13, %c0_9, %c0_10] : memref<8x8x128xf32, #tpu.memory_space<vmem>>, vector<1x8x128xf32>
    %15 = vector.shape_cast %14 : vector<1x8x128xf32> to vector<8x128xf32>
    %cst = arith.constant dense<0.000000e+00> : vector<8x128xf32>
    %16 = tpu.matmul %4, %8, %cst {dimension_numbers = #tpu.dot_dimension_numbers<[1], [0], [0], [1], [0, 0, 1, 1], [], []>} : vector<8x32xf32>, vector<32x128xf32>, vector<8x128xf32> -> vector<8x128xf32>
    %17 = arith.addf %15, %16 : vector<8x128xf32>
    %cst_11 = arith.constant 5.000000e-01 : f32
    %18 = vector.broadcast %cst_11 : f32 to vector<8x128xf32>
    %19 = arith.mulf %18, %17 : vector<8x128xf32>
    %20 = math.tanh %19 : vector<8x128xf32>
    %cst_12 = arith.constant 5.000000e-01 : f32
    %21 = vector.broadcast %cst_12 : f32 to vector<8x128xf32>
    %22 = arith.mulf %21, %20 : vector<8x128xf32>
    %cst_13 = arith.constant 5.000000e-01 : f32
    %23 = vector.broadcast %cst_13 : f32 to vector<8x128xf32>
    %24 = arith.addf %22, %23 : vector<8x128xf32>
    %25 = math.tanh %17 : vector<8x128xf32>
    %26 = vector.extract_strided_slice %24 {offsets = [0, 0], sizes = [8, 32], strides = [1, 1]} : vector<8x128xf32> to vector<8x32xf32>
    %27 = vector.extract_strided_slice %24 {offsets = [0, 32], sizes = [8, 32], strides = [1, 1]} : vector<8x128xf32> to vector<8x32xf32>
    %28 = vector.extract_strided_slice %24 {offsets = [0, 96], sizes = [8, 32], strides = [1, 1]} : vector<8x128xf32> to vector<8x32xf32>
    %29 = vector.extract_strided_slice %25 {offsets = [0, 64], sizes = [8, 32], strides = [1, 1]} : vector<8x128xf32> to vector<8x32xf32>
    %30 = arith.mulf %27, %6 : vector<8x32xf32>
    %31 = arith.mulf %26, %29 : vector<8x32xf32>
    %32 = arith.addf %30, %31 : vector<8x32xf32>
    %33 = math.tanh %32 : vector<8x32xf32>
    %34 = arith.mulf %28, %33 : vector<8x32xf32>
    %35 = tpu.concatenate %34, %5 in 1 : vector<8x32xf32>, vector<8x32xf32> -> vector<8x64xf32>
    %cst_14 = arith.constant dense<0.000000e+00> : vector<8x128xf32>
    %36 = tpu.matmul %35, %9, %cst_14 {dimension_numbers = #tpu.dot_dimension_numbers<[1], [0], [0], [1], [0, 0, 1, 1], [], []>} : vector<8x64xf32>, vector<64x128xf32>, vector<8x128xf32> -> vector<8x128xf32>
    %37 = arith.addf %36, %12 : vector<8x128xf32>
    %cst_15 = arith.constant 5.000000e-01 : f32
    %38 = vector.broadcast %cst_15 : f32 to vector<8x128xf32>
    %39 = arith.mulf %38, %37 : vector<8x128xf32>
    %40 = math.tanh %39 : vector<8x128xf32>
    %cst_16 = arith.constant 5.000000e-01 : f32
    %41 = vector.broadcast %cst_16 : f32 to vector<8x128xf32>
    %42 = arith.mulf %41, %40 : vector<8x128xf32>
    %cst_17 = arith.constant 5.000000e-01 : f32
    %43 = vector.broadcast %cst_17 : f32 to vector<8x128xf32>
    %44 = arith.addf %42, %43 : vector<8x128xf32>
    %45 = math.tanh %37 : vector<8x128xf32>
    %46 = vector.extract_strided_slice %44 {offsets = [0, 0], sizes = [8, 32], strides = [1, 1]} : vector<8x128xf32> to vector<8x32xf32>
    %47 = vector.extract_strided_slice %44 {offsets = [0, 32], sizes = [8, 32], strides = [1, 1]} : vector<8x128xf32> to vector<8x32xf32>
    %48 = vector.extract_strided_slice %44 {offsets = [0, 96], sizes = [8, 32], strides = [1, 1]} : vector<8x128xf32> to vector<8x32xf32>
    %49 = vector.extract_strided_slice %45 {offsets = [0, 64], sizes = [8, 32], strides = [1, 1]} : vector<8x128xf32> to vector<8x32xf32>
    %50 = arith.mulf %47, %7 : vector<8x32xf32>
    %51 = arith.mulf %46, %49 : vector<8x32xf32>
    %52 = arith.addf %50, %51 : vector<8x32xf32>
    %53 = math.tanh %52 : vector<8x32xf32>
    %54 = arith.mulf %48, %53 : vector<8x32xf32>
    %c1_i32 = arith.constant 1 : i32
    %55 = arith.index_cast %c1_i32 : i32 to index
    %c0_18 = arith.constant 0 : index
    %c0_19 = arith.constant 0 : index
    %56 = vector.load %arg1[%55, %c0_18, %c0_19] : memref<8x8x128xf32, #tpu.memory_space<vmem>>, vector<1x8x128xf32>
    %57 = vector.shape_cast %56 : vector<1x8x128xf32> to vector<8x128xf32>
    %cst_20 = arith.constant dense<0.000000e+00> : vector<8x128xf32>
    %58 = tpu.matmul %34, %8, %cst_20 {dimension_numbers = #tpu.dot_dimension_numbers<[1], [0], [0], [1], [0, 0, 1, 1], [], []>} : vector<8x32xf32>, vector<32x128xf32>, vector<8x128xf32> -> vector<8x128xf32>
    %59 = arith.addf %57, %58 : vector<8x128xf32>
    %cst_21 = arith.constant 5.000000e-01 : f32
    %60 = vector.broadcast %cst_21 : f32 to vector<8x128xf32>
    %61 = arith.mulf %60, %59 : vector<8x128xf32>
    %62 = math.tanh %61 : vector<8x128xf32>
    %cst_22 = arith.constant 5.000000e-01 : f32
    %63 = vector.broadcast %cst_22 : f32 to vector<8x128xf32>
    %64 = arith.mulf %63, %62 : vector<8x128xf32>
    %cst_23 = arith.constant 5.000000e-01 : f32
    %65 = vector.broadcast %cst_23 : f32 to vector<8x128xf32>
    %66 = arith.addf %64, %65 : vector<8x128xf32>
    %67 = math.tanh %59 : vector<8x128xf32>
    %68 = vector.extract_strided_slice %66 {offsets = [0, 0], sizes = [8, 32], strides = [1, 1]} : vector<8x128xf32> to vector<8x32xf32>
    %69 = vector.extract_strided_slice %66 {offsets = [0, 32], sizes = [8, 32], strides = [1, 1]} : vector<8x128xf32> to vector<8x32xf32>
    %70 = vector.extract_strided_slice %66 {offsets = [0, 96], sizes = [8, 32], strides = [1, 1]} : vector<8x128xf32> to vector<8x32xf32>
    %71 = vector.extract_strided_slice %67 {offsets = [0, 64], sizes = [8, 32], strides = [1, 1]} : vector<8x128xf32> to vector<8x32xf32>
    %72 = arith.mulf %69, %32 : vector<8x32xf32>
    %73 = arith.mulf %68, %71 : vector<8x32xf32>
    %74 = arith.addf %72, %73 : vector<8x32xf32>
    %75 = math.tanh %74 : vector<8x32xf32>
    %76 = arith.mulf %70, %75 : vector<8x32xf32>
    %77 = tpu.concatenate %76, %54 in 1 : vector<8x32xf32>, vector<8x32xf32> -> vector<8x64xf32>
    %cst_24 = arith.constant dense<0.000000e+00> : vector<8x128xf32>
    %78 = tpu.matmul %77, %9, %cst_24 {dimension_numbers = #tpu.dot_dimension_numbers<[1], [0], [0], [1], [0, 0, 1, 1], [], []>} : vector<8x64xf32>, vector<64x128xf32>, vector<8x128xf32> -> vector<8x128xf32>
    %79 = arith.addf %78, %12 : vector<8x128xf32>
    %cst_25 = arith.constant 5.000000e-01 : f32
    %80 = vector.broadcast %cst_25 : f32 to vector<8x128xf32>
    %81 = arith.mulf %80, %79 : vector<8x128xf32>
    %82 = math.tanh %81 : vector<8x128xf32>
    %cst_26 = arith.constant 5.000000e-01 : f32
    %83 = vector.broadcast %cst_26 : f32 to vector<8x128xf32>
    %84 = arith.mulf %83, %82 : vector<8x128xf32>
    %cst_27 = arith.constant 5.000000e-01 : f32
    %85 = vector.broadcast %cst_27 : f32 to vector<8x128xf32>
    %86 = arith.addf %84, %85 : vector<8x128xf32>
    %87 = math.tanh %79 : vector<8x128xf32>
    %88 = vector.extract_strided_slice %86 {offsets = [0, 0], sizes = [8, 32], strides = [1, 1]} : vector<8x128xf32> to vector<8x32xf32>
    %89 = vector.extract_strided_slice %86 {offsets = [0, 32], sizes = [8, 32], strides = [1, 1]} : vector<8x128xf32> to vector<8x32xf32>
    %90 = vector.extract_strided_slice %86 {offsets = [0, 96], sizes = [8, 32], strides = [1, 1]} : vector<8x128xf32> to vector<8x32xf32>
    %91 = vector.extract_strided_slice %87 {offsets = [0, 64], sizes = [8, 32], strides = [1, 1]} : vector<8x128xf32> to vector<8x32xf32>
    %92 = arith.mulf %89, %52 : vector<8x32xf32>
    %93 = arith.mulf %88, %91 : vector<8x32xf32>
    %94 = arith.addf %92, %93 : vector<8x32xf32>
    %95 = math.tanh %94 : vector<8x32xf32>
    %96 = arith.mulf %90, %95 : vector<8x32xf32>
    %c2_i32 = arith.constant 2 : i32
    %97 = arith.index_cast %c2_i32 : i32 to index
    %c0_28 = arith.constant 0 : index
    %c0_29 = arith.constant 0 : index
    %98 = vector.load %arg1[%97, %c0_28, %c0_29] : memref<8x8x128xf32, #tpu.memory_space<vmem>>, vector<1x8x128xf32>
    %99 = vector.shape_cast %98 : vector<1x8x128xf32> to vector<8x128xf32>
    %cst_30 = arith.constant dense<0.000000e+00> : vector<8x128xf32>
    %100 = tpu.matmul %76, %8, %cst_30 {dimension_numbers = #tpu.dot_dimension_numbers<[1], [0], [0], [1], [0, 0, 1, 1], [], []>} : vector<8x32xf32>, vector<32x128xf32>, vector<8x128xf32> -> vector<8x128xf32>
    %101 = arith.addf %99, %100 : vector<8x128xf32>
    %cst_31 = arith.constant 5.000000e-01 : f32
    %102 = vector.broadcast %cst_31 : f32 to vector<8x128xf32>
    %103 = arith.mulf %102, %101 : vector<8x128xf32>
    %104 = math.tanh %103 : vector<8x128xf32>
    %cst_32 = arith.constant 5.000000e-01 : f32
    %105 = vector.broadcast %cst_32 : f32 to vector<8x128xf32>
    %106 = arith.mulf %105, %104 : vector<8x128xf32>
    %cst_33 = arith.constant 5.000000e-01 : f32
    %107 = vector.broadcast %cst_33 : f32 to vector<8x128xf32>
    %108 = arith.addf %106, %107 : vector<8x128xf32>
    %109 = math.tanh %101 : vector<8x128xf32>
    %110 = vector.extract_strided_slice %108 {offsets = [0, 0], sizes = [8, 32], strides = [1, 1]} : vector<8x128xf32> to vector<8x32xf32>
    %111 = vector.extract_strided_slice %108 {offsets = [0, 32], sizes = [8, 32], strides = [1, 1]} : vector<8x128xf32> to vector<8x32xf32>
    %112 = vector.extract_strided_slice %108 {offsets = [0, 96], sizes = [8, 32], strides = [1, 1]} : vector<8x128xf32> to vector<8x32xf32>
    %113 = vector.extract_strided_slice %109 {offsets = [0, 64], sizes = [8, 32], strides = [1, 1]} : vector<8x128xf32> to vector<8x32xf32>
    %114 = arith.mulf %111, %74 : vector<8x32xf32>
    %115 = arith.mulf %110, %113 : vector<8x32xf32>
    %116 = arith.addf %114, %115 : vector<8x32xf32>
    %117 = math.tanh %116 : vector<8x32xf32>
    %118 = arith.mulf %112, %117 : vector<8x32xf32>
    %119 = tpu.concatenate %118, %96 in 1 : vector<8x32xf32>, vector<8x32xf32> -> vector<8x64xf32>
    %cst_34 = arith.constant dense<0.000000e+00> : vector<8x128xf32>
    %120 = tpu.matmul %119, %9, %cst_34 {dimension_numbers = #tpu.dot_dimension_numbers<[1], [0], [0], [1], [0, 0, 1, 1], [], []>} : vector<8x64xf32>, vector<64x128xf32>, vector<8x128xf32> -> vector<8x128xf32>
    %121 = arith.addf %120, %12 : vector<8x128xf32>
    %cst_35 = arith.constant 5.000000e-01 : f32
    %122 = vector.broadcast %cst_35 : f32 to vector<8x128xf32>
    %123 = arith.mulf %122, %121 : vector<8x128xf32>
    %124 = math.tanh %123 : vector<8x128xf32>
    %cst_36 = arith.constant 5.000000e-01 : f32
    %125 = vector.broadcast %cst_36 : f32 to vector<8x128xf32>
    %126 = arith.mulf %125, %124 : vector<8x128xf32>
    %cst_37 = arith.constant 5.000000e-01 : f32
    %127 = vector.broadcast %cst_37 : f32 to vector<8x128xf32>
    %128 = arith.addf %126, %127 : vector<8x128xf32>
    %129 = math.tanh %121 : vector<8x128xf32>
    %130 = vector.extract_strided_slice %128 {offsets = [0, 0], sizes = [8, 32], strides = [1, 1]} : vector<8x128xf32> to vector<8x32xf32>
    %131 = vector.extract_strided_slice %128 {offsets = [0, 32], sizes = [8, 32], strides = [1, 1]} : vector<8x128xf32> to vector<8x32xf32>
    %132 = vector.extract_strided_slice %128 {offsets = [0, 96], sizes = [8, 32], strides = [1, 1]} : vector<8x128xf32> to vector<8x32xf32>
    %133 = vector.extract_strided_slice %129 {offsets = [0, 64], sizes = [8, 32], strides = [1, 1]} : vector<8x128xf32> to vector<8x32xf32>
    %134 = arith.mulf %131, %94 : vector<8x32xf32>
    %135 = arith.mulf %130, %133 : vector<8x32xf32>
    %136 = arith.addf %134, %135 : vector<8x32xf32>
    %137 = math.tanh %136 : vector<8x32xf32>
    %138 = arith.mulf %132, %137 : vector<8x32xf32>
    %c3_i32 = arith.constant 3 : i32
    %139 = arith.index_cast %c3_i32 : i32 to index
    %c0_38 = arith.constant 0 : index
    %c0_39 = arith.constant 0 : index
    %140 = vector.load %arg1[%139, %c0_38, %c0_39] : memref<8x8x128xf32, #tpu.memory_space<vmem>>, vector<1x8x128xf32>
    %141 = vector.shape_cast %140 : vector<1x8x128xf32> to vector<8x128xf32>
    %cst_40 = arith.constant dense<0.000000e+00> : vector<8x128xf32>
    %142 = tpu.matmul %118, %8, %cst_40 {dimension_numbers = #tpu.dot_dimension_numbers<[1], [0], [0], [1], [0, 0, 1, 1], [], []>} : vector<8x32xf32>, vector<32x128xf32>, vector<8x128xf32> -> vector<8x128xf32>
    %143 = arith.addf %141, %142 : vector<8x128xf32>
    %cst_41 = arith.constant 5.000000e-01 : f32
    %144 = vector.broadcast %cst_41 : f32 to vector<8x128xf32>
    %145 = arith.mulf %144, %143 : vector<8x128xf32>
    %146 = math.tanh %145 : vector<8x128xf32>
    %cst_42 = arith.constant 5.000000e-01 : f32
    %147 = vector.broadcast %cst_42 : f32 to vector<8x128xf32>
    %148 = arith.mulf %147, %146 : vector<8x128xf32>
    %cst_43 = arith.constant 5.000000e-01 : f32
    %149 = vector.broadcast %cst_43 : f32 to vector<8x128xf32>
    %150 = arith.addf %148, %149 : vector<8x128xf32>
    %151 = math.tanh %143 : vector<8x128xf32>
    %152 = vector.extract_strided_slice %150 {offsets = [0, 0], sizes = [8, 32], strides = [1, 1]} : vector<8x128xf32> to vector<8x32xf32>
    %153 = vector.extract_strided_slice %150 {offsets = [0, 32], sizes = [8, 32], strides = [1, 1]} : vector<8x128xf32> to vector<8x32xf32>
    %154 = vector.extract_strided_slice %150 {offsets = [0, 96], sizes = [8, 32], strides = [1, 1]} : vector<8x128xf32> to vector<8x32xf32>
    %155 = vector.extract_strided_slice %151 {offsets = [0, 64], sizes = [8, 32], strides = [1, 1]} : vector<8x128xf32> to vector<8x32xf32>
    %156 = arith.mulf %153, %116 : vector<8x32xf32>
    %157 = arith.mulf %152, %155 : vector<8x32xf32>
    %158 = arith.addf %156, %157 : vector<8x32xf32>
    %159 = math.tanh %158 : vector<8x32xf32>
    %160 = arith.mulf %154, %159 : vector<8x32xf32>
    %161 = tpu.concatenate %160, %138 in 1 : vector<8x32xf32>, vector<8x32xf32> -> vector<8x64xf32>
    %cst_44 = arith.constant dense<0.000000e+00> : vector<8x128xf32>
    %162 = tpu.matmul %161, %9, %cst_44 {dimension_numbers = #tpu.dot_dimension_numbers<[1], [0], [0], [1], [0, 0, 1, 1], [], []>} : vector<8x64xf32>, vector<64x128xf32>, vector<8x128xf32> -> vector<8x128xf32>
    %163 = arith.addf %162, %12 : vector<8x128xf32>
    %cst_45 = arith.constant 5.000000e-01 : f32
    %164 = vector.broadcast %cst_45 : f32 to vector<8x128xf32>
    %165 = arith.mulf %164, %163 : vector<8x128xf32>
    %166 = math.tanh %165 : vector<8x128xf32>
    %cst_46 = arith.constant 5.000000e-01 : f32
    %167 = vector.broadcast %cst_46 : f32 to vector<8x128xf32>
    %168 = arith.mulf %167, %166 : vector<8x128xf32>
    %cst_47 = arith.constant 5.000000e-01 : f32
    %169 = vector.broadcast %cst_47 : f32 to vector<8x128xf32>
    %170 = arith.addf %168, %169 : vector<8x128xf32>
    %171 = math.tanh %163 : vector<8x128xf32>
    %172 = vector.extract_strided_slice %170 {offsets = [0, 0], sizes = [8, 32], strides = [1, 1]} : vector<8x128xf32> to vector<8x32xf32>
    %173 = vector.extract_strided_slice %170 {offsets = [0, 32], sizes = [8, 32], strides = [1, 1]} : vector<8x128xf32> to vector<8x32xf32>
    %174 = vector.extract_strided_slice %170 {offsets = [0, 96], sizes = [8, 32], strides = [1, 1]} : vector<8x128xf32> to vector<8x32xf32>
    %175 = vector.extract_strided_slice %171 {offsets = [0, 64], sizes = [8, 32], strides = [1, 1]} : vector<8x128xf32> to vector<8x32xf32>
    %176 = arith.mulf %173, %136 : vector<8x32xf32>
    %177 = arith.mulf %172, %175 : vector<8x32xf32>
    %178 = arith.addf %176, %177 : vector<8x32xf32>
    %179 = math.tanh %178 : vector<8x32xf32>
    %180 = arith.mulf %174, %179 : vector<8x32xf32>
    %c4_i32 = arith.constant 4 : i32
    %181 = arith.index_cast %c4_i32 : i32 to index
    %c0_48 = arith.constant 0 : index
    %c0_49 = arith.constant 0 : index
    %182 = vector.load %arg1[%181, %c0_48, %c0_49] : memref<8x8x128xf32, #tpu.memory_space<vmem>>, vector<1x8x128xf32>
    %183 = vector.shape_cast %182 : vector<1x8x128xf32> to vector<8x128xf32>
    %cst_50 = arith.constant dense<0.000000e+00> : vector<8x128xf32>
    %184 = tpu.matmul %160, %8, %cst_50 {dimension_numbers = #tpu.dot_dimension_numbers<[1], [0], [0], [1], [0, 0, 1, 1], [], []>} : vector<8x32xf32>, vector<32x128xf32>, vector<8x128xf32> -> vector<8x128xf32>
    %185 = arith.addf %183, %184 : vector<8x128xf32>
    %cst_51 = arith.constant 5.000000e-01 : f32
    %186 = vector.broadcast %cst_51 : f32 to vector<8x128xf32>
    %187 = arith.mulf %186, %185 : vector<8x128xf32>
    %188 = math.tanh %187 : vector<8x128xf32>
    %cst_52 = arith.constant 5.000000e-01 : f32
    %189 = vector.broadcast %cst_52 : f32 to vector<8x128xf32>
    %190 = arith.mulf %189, %188 : vector<8x128xf32>
    %cst_53 = arith.constant 5.000000e-01 : f32
    %191 = vector.broadcast %cst_53 : f32 to vector<8x128xf32>
    %192 = arith.addf %190, %191 : vector<8x128xf32>
    %193 = math.tanh %185 : vector<8x128xf32>
    %194 = vector.extract_strided_slice %192 {offsets = [0, 0], sizes = [8, 32], strides = [1, 1]} : vector<8x128xf32> to vector<8x32xf32>
    %195 = vector.extract_strided_slice %192 {offsets = [0, 32], sizes = [8, 32], strides = [1, 1]} : vector<8x128xf32> to vector<8x32xf32>
    %196 = vector.extract_strided_slice %192 {offsets = [0, 96], sizes = [8, 32], strides = [1, 1]} : vector<8x128xf32> to vector<8x32xf32>
    %197 = vector.extract_strided_slice %193 {offsets = [0, 64], sizes = [8, 32], strides = [1, 1]} : vector<8x128xf32> to vector<8x32xf32>
    %198 = arith.mulf %195, %158 : vector<8x32xf32>
    %199 = arith.mulf %194, %197 : vector<8x32xf32>
    %200 = arith.addf %198, %199 : vector<8x32xf32>
    %201 = math.tanh %200 : vector<8x32xf32>
    %202 = arith.mulf %196, %201 : vector<8x32xf32>
    %203 = tpu.concatenate %202, %180 in 1 : vector<8x32xf32>, vector<8x32xf32> -> vector<8x64xf32>
    %cst_54 = arith.constant dense<0.000000e+00> : vector<8x128xf32>
    %204 = tpu.matmul %203, %9, %cst_54 {dimension_numbers = #tpu.dot_dimension_numbers<[1], [0], [0], [1], [0, 0, 1, 1], [], []>} : vector<8x64xf32>, vector<64x128xf32>, vector<8x128xf32> -> vector<8x128xf32>
    %205 = arith.addf %204, %12 : vector<8x128xf32>
    %cst_55 = arith.constant 5.000000e-01 : f32
    %206 = vector.broadcast %cst_55 : f32 to vector<8x128xf32>
    %207 = arith.mulf %206, %205 : vector<8x128xf32>
    %208 = math.tanh %207 : vector<8x128xf32>
    %cst_56 = arith.constant 5.000000e-01 : f32
    %209 = vector.broadcast %cst_56 : f32 to vector<8x128xf32>
    %210 = arith.mulf %209, %208 : vector<8x128xf32>
    %cst_57 = arith.constant 5.000000e-01 : f32
    %211 = vector.broadcast %cst_57 : f32 to vector<8x128xf32>
    %212 = arith.addf %210, %211 : vector<8x128xf32>
    %213 = math.tanh %205 : vector<8x128xf32>
    %214 = vector.extract_strided_slice %212 {offsets = [0, 0], sizes = [8, 32], strides = [1, 1]} : vector<8x128xf32> to vector<8x32xf32>
    %215 = vector.extract_strided_slice %212 {offsets = [0, 32], sizes = [8, 32], strides = [1, 1]} : vector<8x128xf32> to vector<8x32xf32>
    %216 = vector.extract_strided_slice %212 {offsets = [0, 96], sizes = [8, 32], strides = [1, 1]} : vector<8x128xf32> to vector<8x32xf32>
    %217 = vector.extract_strided_slice %213 {offsets = [0, 64], sizes = [8, 32], strides = [1, 1]} : vector<8x128xf32> to vector<8x32xf32>
    %218 = arith.mulf %215, %178 : vector<8x32xf32>
    %219 = arith.mulf %214, %217 : vector<8x32xf32>
    %220 = arith.addf %218, %219 : vector<8x32xf32>
    %221 = math.tanh %220 : vector<8x32xf32>
    %222 = arith.mulf %216, %221 : vector<8x32xf32>
    %c5_i32 = arith.constant 5 : i32
    %223 = arith.index_cast %c5_i32 : i32 to index
    %c0_58 = arith.constant 0 : index
    %c0_59 = arith.constant 0 : index
    %224 = vector.load %arg1[%223, %c0_58, %c0_59] : memref<8x8x128xf32, #tpu.memory_space<vmem>>, vector<1x8x128xf32>
    %225 = vector.shape_cast %224 : vector<1x8x128xf32> to vector<8x128xf32>
    %cst_60 = arith.constant dense<0.000000e+00> : vector<8x128xf32>
    %226 = tpu.matmul %202, %8, %cst_60 {dimension_numbers = #tpu.dot_dimension_numbers<[1], [0], [0], [1], [0, 0, 1, 1], [], []>} : vector<8x32xf32>, vector<32x128xf32>, vector<8x128xf32> -> vector<8x128xf32>
    %227 = arith.addf %225, %226 : vector<8x128xf32>
    %cst_61 = arith.constant 5.000000e-01 : f32
    %228 = vector.broadcast %cst_61 : f32 to vector<8x128xf32>
    %229 = arith.mulf %228, %227 : vector<8x128xf32>
    %230 = math.tanh %229 : vector<8x128xf32>
    %cst_62 = arith.constant 5.000000e-01 : f32
    %231 = vector.broadcast %cst_62 : f32 to vector<8x128xf32>
    %232 = arith.mulf %231, %230 : vector<8x128xf32>
    %cst_63 = arith.constant 5.000000e-01 : f32
    %233 = vector.broadcast %cst_63 : f32 to vector<8x128xf32>
    %234 = arith.addf %232, %233 : vector<8x128xf32>
    %235 = math.tanh %227 : vector<8x128xf32>
    %236 = vector.extract_strided_slice %234 {offsets = [0, 0], sizes = [8, 32], strides = [1, 1]} : vector<8x128xf32> to vector<8x32xf32>
    %237 = vector.extract_strided_slice %234 {offsets = [0, 32], sizes = [8, 32], strides = [1, 1]} : vector<8x128xf32> to vector<8x32xf32>
    %238 = vector.extract_strided_slice %234 {offsets = [0, 96], sizes = [8, 32], strides = [1, 1]} : vector<8x128xf32> to vector<8x32xf32>
    %239 = vector.extract_strided_slice %235 {offsets = [0, 64], sizes = [8, 32], strides = [1, 1]} : vector<8x128xf32> to vector<8x32xf32>
    %240 = arith.mulf %237, %200 : vector<8x32xf32>
    %241 = arith.mulf %236, %239 : vector<8x32xf32>
    %242 = arith.addf %240, %241 : vector<8x32xf32>
    %243 = math.tanh %242 : vector<8x32xf32>
    %244 = arith.mulf %238, %243 : vector<8x32xf32>
    %245 = tpu.concatenate %244, %222 in 1 : vector<8x32xf32>, vector<8x32xf32> -> vector<8x64xf32>
    %cst_64 = arith.constant dense<0.000000e+00> : vector<8x128xf32>
    %246 = tpu.matmul %245, %9, %cst_64 {dimension_numbers = #tpu.dot_dimension_numbers<[1], [0], [0], [1], [0, 0, 1, 1], [], []>} : vector<8x64xf32>, vector<64x128xf32>, vector<8x128xf32> -> vector<8x128xf32>
    %247 = arith.addf %246, %12 : vector<8x128xf32>
    %cst_65 = arith.constant 5.000000e-01 : f32
    %248 = vector.broadcast %cst_65 : f32 to vector<8x128xf32>
    %249 = arith.mulf %248, %247 : vector<8x128xf32>
    %250 = math.tanh %249 : vector<8x128xf32>
    %cst_66 = arith.constant 5.000000e-01 : f32
    %251 = vector.broadcast %cst_66 : f32 to vector<8x128xf32>
    %252 = arith.mulf %251, %250 : vector<8x128xf32>
    %cst_67 = arith.constant 5.000000e-01 : f32
    %253 = vector.broadcast %cst_67 : f32 to vector<8x128xf32>
    %254 = arith.addf %252, %253 : vector<8x128xf32>
    %255 = math.tanh %247 : vector<8x128xf32>
    %256 = vector.extract_strided_slice %254 {offsets = [0, 0], sizes = [8, 32], strides = [1, 1]} : vector<8x128xf32> to vector<8x32xf32>
    %257 = vector.extract_strided_slice %254 {offsets = [0, 32], sizes = [8, 32], strides = [1, 1]} : vector<8x128xf32> to vector<8x32xf32>
    %258 = vector.extract_strided_slice %254 {offsets = [0, 96], sizes = [8, 32], strides = [1, 1]} : vector<8x128xf32> to vector<8x32xf32>
    %259 = vector.extract_strided_slice %255 {offsets = [0, 64], sizes = [8, 32], strides = [1, 1]} : vector<8x128xf32> to vector<8x32xf32>
    %260 = arith.mulf %257, %220 : vector<8x32xf32>
    %261 = arith.mulf %256, %259 : vector<8x32xf32>
    %262 = arith.addf %260, %261 : vector<8x32xf32>
    %263 = math.tanh %262 : vector<8x32xf32>
    %264 = arith.mulf %258, %263 : vector<8x32xf32>
    %c6_i32 = arith.constant 6 : i32
    %265 = arith.index_cast %c6_i32 : i32 to index
    %c0_68 = arith.constant 0 : index
    %c0_69 = arith.constant 0 : index
    %266 = vector.load %arg1[%265, %c0_68, %c0_69] : memref<8x8x128xf32, #tpu.memory_space<vmem>>, vector<1x8x128xf32>
    %267 = vector.shape_cast %266 : vector<1x8x128xf32> to vector<8x128xf32>
    %cst_70 = arith.constant dense<0.000000e+00> : vector<8x128xf32>
    %268 = tpu.matmul %244, %8, %cst_70 {dimension_numbers = #tpu.dot_dimension_numbers<[1], [0], [0], [1], [0, 0, 1, 1], [], []>} : vector<8x32xf32>, vector<32x128xf32>, vector<8x128xf32> -> vector<8x128xf32>
    %269 = arith.addf %267, %268 : vector<8x128xf32>
    %cst_71 = arith.constant 5.000000e-01 : f32
    %270 = vector.broadcast %cst_71 : f32 to vector<8x128xf32>
    %271 = arith.mulf %270, %269 : vector<8x128xf32>
    %272 = math.tanh %271 : vector<8x128xf32>
    %cst_72 = arith.constant 5.000000e-01 : f32
    %273 = vector.broadcast %cst_72 : f32 to vector<8x128xf32>
    %274 = arith.mulf %273, %272 : vector<8x128xf32>
    %cst_73 = arith.constant 5.000000e-01 : f32
    %275 = vector.broadcast %cst_73 : f32 to vector<8x128xf32>
    %276 = arith.addf %274, %275 : vector<8x128xf32>
    %277 = math.tanh %269 : vector<8x128xf32>
    %278 = vector.extract_strided_slice %276 {offsets = [0, 0], sizes = [8, 32], strides = [1, 1]} : vector<8x128xf32> to vector<8x32xf32>
    %279 = vector.extract_strided_slice %276 {offsets = [0, 32], sizes = [8, 32], strides = [1, 1]} : vector<8x128xf32> to vector<8x32xf32>
    %280 = vector.extract_strided_slice %276 {offsets = [0, 96], sizes = [8, 32], strides = [1, 1]} : vector<8x128xf32> to vector<8x32xf32>
    %281 = vector.extract_strided_slice %277 {offsets = [0, 64], sizes = [8, 32], strides = [1, 1]} : vector<8x128xf32> to vector<8x32xf32>
    %282 = arith.mulf %279, %242 : vector<8x32xf32>
    %283 = arith.mulf %278, %281 : vector<8x32xf32>
    %284 = arith.addf %282, %283 : vector<8x32xf32>
    %285 = math.tanh %284 : vector<8x32xf32>
    %286 = arith.mulf %280, %285 : vector<8x32xf32>
    %287 = tpu.concatenate %286, %264 in 1 : vector<8x32xf32>, vector<8x32xf32> -> vector<8x64xf32>
    %cst_74 = arith.constant dense<0.000000e+00> : vector<8x128xf32>
    %288 = tpu.matmul %287, %9, %cst_74 {dimension_numbers = #tpu.dot_dimension_numbers<[1], [0], [0], [1], [0, 0, 1, 1], [], []>} : vector<8x64xf32>, vector<64x128xf32>, vector<8x128xf32> -> vector<8x128xf32>
    %289 = arith.addf %288, %12 : vector<8x128xf32>
    %cst_75 = arith.constant 5.000000e-01 : f32
    %290 = vector.broadcast %cst_75 : f32 to vector<8x128xf32>
    %291 = arith.mulf %290, %289 : vector<8x128xf32>
    %292 = math.tanh %291 : vector<8x128xf32>
    %cst_76 = arith.constant 5.000000e-01 : f32
    %293 = vector.broadcast %cst_76 : f32 to vector<8x128xf32>
    %294 = arith.mulf %293, %292 : vector<8x128xf32>
    %cst_77 = arith.constant 5.000000e-01 : f32
    %295 = vector.broadcast %cst_77 : f32 to vector<8x128xf32>
    %296 = arith.addf %294, %295 : vector<8x128xf32>
    %297 = math.tanh %289 : vector<8x128xf32>
    %298 = vector.extract_strided_slice %296 {offsets = [0, 0], sizes = [8, 32], strides = [1, 1]} : vector<8x128xf32> to vector<8x32xf32>
    %299 = vector.extract_strided_slice %296 {offsets = [0, 32], sizes = [8, 32], strides = [1, 1]} : vector<8x128xf32> to vector<8x32xf32>
    %300 = vector.extract_strided_slice %296 {offsets = [0, 96], sizes = [8, 32], strides = [1, 1]} : vector<8x128xf32> to vector<8x32xf32>
    %301 = vector.extract_strided_slice %297 {offsets = [0, 64], sizes = [8, 32], strides = [1, 1]} : vector<8x128xf32> to vector<8x32xf32>
    %302 = arith.mulf %299, %262 : vector<8x32xf32>
    %303 = arith.mulf %298, %301 : vector<8x32xf32>
    %304 = arith.addf %302, %303 : vector<8x32xf32>
    %305 = math.tanh %304 : vector<8x32xf32>
    %306 = arith.mulf %300, %305 : vector<8x32xf32>
    %c7_i32 = arith.constant 7 : i32
    %307 = arith.index_cast %c7_i32 : i32 to index
    %c0_78 = arith.constant 0 : index
    %c0_79 = arith.constant 0 : index
    %308 = vector.load %arg1[%307, %c0_78, %c0_79] : memref<8x8x128xf32, #tpu.memory_space<vmem>>, vector<1x8x128xf32>
    %309 = vector.shape_cast %308 : vector<1x8x128xf32> to vector<8x128xf32>
    %cst_80 = arith.constant dense<0.000000e+00> : vector<8x128xf32>
    %310 = tpu.matmul %286, %8, %cst_80 {dimension_numbers = #tpu.dot_dimension_numbers<[1], [0], [0], [1], [0, 0, 1, 1], [], []>} : vector<8x32xf32>, vector<32x128xf32>, vector<8x128xf32> -> vector<8x128xf32>
    %311 = arith.addf %309, %310 : vector<8x128xf32>
    %cst_81 = arith.constant 5.000000e-01 : f32
    %312 = vector.broadcast %cst_81 : f32 to vector<8x128xf32>
    %313 = arith.mulf %312, %311 : vector<8x128xf32>
    %314 = math.tanh %313 : vector<8x128xf32>
    %cst_82 = arith.constant 5.000000e-01 : f32
    %315 = vector.broadcast %cst_82 : f32 to vector<8x128xf32>
    %316 = arith.mulf %315, %314 : vector<8x128xf32>
    %cst_83 = arith.constant 5.000000e-01 : f32
    %317 = vector.broadcast %cst_83 : f32 to vector<8x128xf32>
    %318 = arith.addf %316, %317 : vector<8x128xf32>
    %319 = math.tanh %311 : vector<8x128xf32>
    %320 = vector.extract_strided_slice %318 {offsets = [0, 0], sizes = [8, 32], strides = [1, 1]} : vector<8x128xf32> to vector<8x32xf32>
    %321 = vector.extract_strided_slice %318 {offsets = [0, 32], sizes = [8, 32], strides = [1, 1]} : vector<8x128xf32> to vector<8x32xf32>
    %322 = vector.extract_strided_slice %318 {offsets = [0, 96], sizes = [8, 32], strides = [1, 1]} : vector<8x128xf32> to vector<8x32xf32>
    %323 = vector.extract_strided_slice %319 {offsets = [0, 64], sizes = [8, 32], strides = [1, 1]} : vector<8x128xf32> to vector<8x32xf32>
    %324 = arith.mulf %321, %284 : vector<8x32xf32>
    %325 = arith.mulf %320, %323 : vector<8x32xf32>
    %326 = arith.addf %324, %325 : vector<8x32xf32>
    %327 = math.tanh %326 : vector<8x32xf32>
    %328 = arith.mulf %322, %327 : vector<8x32xf32>
    %329 = tpu.concatenate %328, %306 in 1 : vector<8x32xf32>, vector<8x32xf32> -> vector<8x64xf32>
    %cst_84 = arith.constant dense<0.000000e+00> : vector<8x128xf32>
    %330 = tpu.matmul %329, %9, %cst_84 {dimension_numbers = #tpu.dot_dimension_numbers<[1], [0], [0], [1], [0, 0, 1, 1], [], []>} : vector<8x64xf32>, vector<64x128xf32>, vector<8x128xf32> -> vector<8x128xf32>
    %331 = arith.addf %330, %12 : vector<8x128xf32>
    %cst_85 = arith.constant 5.000000e-01 : f32
    %332 = vector.broadcast %cst_85 : f32 to vector<8x128xf32>
    %333 = arith.mulf %332, %331 : vector<8x128xf32>
    %334 = math.tanh %333 : vector<8x128xf32>
    %cst_86 = arith.constant 5.000000e-01 : f32
    %335 = vector.broadcast %cst_86 : f32 to vector<8x128xf32>
    %336 = arith.mulf %335, %334 : vector<8x128xf32>
    %cst_87 = arith.constant 5.000000e-01 : f32
    %337 = vector.broadcast %cst_87 : f32 to vector<8x128xf32>
    %338 = arith.addf %336, %337 : vector<8x128xf32>
    %339 = math.tanh %331 : vector<8x128xf32>
    %340 = vector.extract_strided_slice %338 {offsets = [0, 0], sizes = [8, 32], strides = [1, 1]} : vector<8x128xf32> to vector<8x32xf32>
    %341 = vector.extract_strided_slice %338 {offsets = [0, 32], sizes = [8, 32], strides = [1, 1]} : vector<8x128xf32> to vector<8x32xf32>
    %342 = vector.extract_strided_slice %338 {offsets = [0, 96], sizes = [8, 32], strides = [1, 1]} : vector<8x128xf32> to vector<8x32xf32>
    %343 = vector.extract_strided_slice %339 {offsets = [0, 64], sizes = [8, 32], strides = [1, 1]} : vector<8x128xf32> to vector<8x32xf32>
    %344 = arith.mulf %341, %304 : vector<8x32xf32>
    %345 = arith.mulf %340, %343 : vector<8x32xf32>
    %346 = arith.addf %344, %345 : vector<8x32xf32>
    %347 = math.tanh %346 : vector<8x32xf32>
    %348 = arith.mulf %342, %347 : vector<8x32xf32>
    %c8_i32 = arith.constant 8 : i32
    %349 = tpu.concatenate %328, %348, %326, %346 in 1 : vector<8x32xf32>, vector<8x32xf32>, vector<8x32xf32>, vector<8x32xf32> -> vector<8x128xf32>
    %c0_88 = arith.constant 0 : index
    %c0_89 = arith.constant 0 : index
    %350 = vector.load %arg5[%c0_88, %c0_89] : memref<8x128xf32, #tpu.memory_space<vmem>>, vector<8x128xf32>
    tpu.vector_store %arg5[%c0_88, %c0_89], %349 {strides = array<i32>} : memref<8x128xf32, #tpu.memory_space<vmem>>, vector<8x128xf32>,
    return
  }
  func.func @transform_0(%arg0: i32) -> (i32, i32, i32) {
    %c0_i32 = arith.constant 0 : i32
    %c0_i32_0 = arith.constant 0 : i32
    %c0_i32_1 = arith.constant 0 : i32
    return %arg0, %c0_i32, %c0_i32_0 : i32, i32, i32
  }
  func.func @transform_1(%arg0: i32) -> (i32, i32) {
    %c0_i32 = arith.constant 0 : i32
    %c0_i32_0 = arith.constant 0 : i32
    %c0_i32_1 = arith.constant 0 : i32
    return %c0_i32, %c0_i32_0 : i32, i32
  }
  func.func @transform_2(%arg0: i32) -> (i32, i32) {
    %c0_i32 = arith.constant 0 : i32
    %c0_i32_0 = arith.constant 0 : i32
    %c0_i32_1 = arith.constant 0 : i32
    return %c0_i32, %c0_i32_0 : i32, i32
  }
  func.func @transform_3(%arg0: i32) -> (i32, i32) {
    %c0_i32 = arith.constant 0 : i32
    %c0_i32_0 = arith.constant 0 : i32
    %c0_i32_1 = arith.constant 0 : i32
    return %c0_i32, %c0_i32_0 : i32, i32
  }
  func.func @transform_4(%arg0: i32) -> (i32, i32) {
    %c0_i32 = arith.constant 0 : i32
    %c0_i32_0 = arith.constant 0 : i32
    %c0_i32_1 = arith.constant 0 : i32
    return %c0_i32, %c0_i32_0 : i32, i32
  }
}

</mosaic_0001>

<llo_original>
// kernel: tpu_custom_call.1
$region0: #{tpu_custom_call.1}
  #allocation0 [shape = 'u32[]', space=smem, size = 0x4, offset = 0x4, fixed_abs, tag = 'smem constant byte address 0x4 - core index']
  #allocation1 [shape = 'u32[144,128]{1,0:T(1,128)}', space=vmem, size = 0x12000, scoped, tag = 'internal scratch']
  %s0 = inlined_call_operand.hbm [shape: f32[8,8,128], index: 0, kind: input, shape index: {}]
  %s1 = inlined_call_operand.hbm [shape: f32[32,128], index: 1, kind: input, shape index: {}]
  %s2 = inlined_call_operand.hbm [shape: f32[64,128], index: 2, kind: input, shape index: {}]
  %s3 = inlined_call_operand.vmem [shape: f32[1,128], index: 3, kind: input, shape index: {}]
  %s4 = inlined_call_operand.hbm [shape: f32[8,128], index: 4, kind: output, shape index: {}]
  %s5 = sld [smem:[#allocation0]]
  $region42: #{tpu_custom_call.1} parent=0
    _
  %s7 = ssub.s32 1, %s5
  %s8 = scalar_select 0, %s7, %s5
  $region1: #{tpu_custom_call.1} parent=0
    #allocation2 [shape = 'u8[32768]{0}', space=vmem, size = 0x8000, scoped, tag = 'input window, operand 0, single buffered']
    #allocation3 [shape = 's32[1]{0}', space=sflag, size = 0x4, scoped, tag = 'scoped memory for tpu_custom_call.1']
    #allocation4 [shape = 's32[1]{0}', space=sflag, size = 0x4, scoped, tag = 'scoped memory for tpu_custom_call.1']
    #allocation5 [shape = 'u8[16384]{0}', space=vmem, size = 0x4000, scoped, tag = 'input window, operand 1, single buffered']
    #allocation6 [shape = 's32[1]{0}', space=sflag, size = 0x4, scoped, tag = 'scoped memory for tpu_custom_call.1']
    #allocation7 [shape = 'u8[32768]{0}', space=vmem, size = 0x8000, scoped, tag = 'input window, operand 2, single buffered']
    #allocation8 [shape = 'u8[4096]{0}', space=vmem, size = 0x1000, scoped, tag = 'output window, operand 0, single buffered']
    %9 = vsyncpa [#allocation3], 0
    %10 = vsyncpa [#allocation6], 0
    %11 = vsyncpa [#allocation4], 0
    // Predicated region
    $region2: #{tpu_custom_call.1} parent=1 // pred_check
      _
    $region3: #{tpu_custom_call.1} parent=1 // pred_check_branch
      %13 = sbr.rel (0) target = $region5
    $region4: #{tpu_custom_call.1} parent=1 // pred_region
      %s15 = ssub.s32 1024, 1024
      %16 = vsyncadd [#allocation3], %s15
      %s17 = sshll.u32 [#allocation2], 4
      %s18 = int_to_ptr.vmem [resolvable:$true] %s17
      %23 = dma.hbm_to_vmem [thread:$0]  %s0, 1024, %s18, [#allocation3], 128, 128, 8
    $region5: #{tpu_custom_call.1} parent=1 // pred_fallthru
      _
    // Predicated region
    $region6: #{tpu_custom_call.1} parent=1 // pred_check
      _
    $region7: #{tpu_custom_call.1} parent=1 // pred_check_branch
      %25 = sbr.rel (0) target = $region9
    $region8: #{tpu_custom_call.1} parent=1 // pred_region
      %s27 = ssub.s32 512, 512
      %28 = vsyncadd [#allocation6], %s27
      %s29 = sshll.u32 [#allocation5], 4
      %s30 = int_to_ptr.vmem [resolvable:$true] %s29
      %35 = dma.hbm_to_vmem [thread:$0]  %s1, 512, %s30, [#allocation6], 128, 128, 8
    $region9: #{tpu_custom_call.1} parent=1 // pred_fallthru
      _
    // Predicated region
    $region10: #{tpu_custom_call.1} parent=1 // pred_check
      _
    $region11: #{tpu_custom_call.1} parent=1 // pred_check_branch
      %37 = sbr.rel (0) target = $region13
    $region12: #{tpu_custom_call.1} parent=1 // pred_region
      %s39 = ssub.s32 1024, 1024
      %40 = vsyncadd [#allocation6], %s39
      %s41 = sshll.u32 [#allocation7], 4
      %s42 = int_to_ptr.vmem [resolvable:$true] %s41
      %47 = dma.hbm_to_vmem [thread:$0]  %s2, 1024, %s42, [#allocation6], 128, 128, 8
    $region13: #{tpu_custom_call.1} parent=1 // pred_fallthru
      _
    // Predicated region
    $region14: #{tpu_custom_call.1} parent=1 // pred_check
      _
    $region15: #{tpu_custom_call.1} parent=1 // pred_check_branch
      %49 = sbr.rel (0) target = $region17
    $region16: #{tpu_custom_call.1} parent=1 // pred_region
      _
    $region17: #{tpu_custom_call.1} parent=1 // pred_fallthru
      _
    // Predicated region
    $region18: #{tpu_custom_call.1} parent=1 // pred_check
      _
    $region19: #{tpu_custom_call.1} parent=1 // pred_check_branch
      %51 = sbr.rel (0) target = $region21
    $region20: #{tpu_custom_call.1} parent=1 // pred_region
      %52 = dma.done [#allocation3], 1024
    $region21: #{tpu_custom_call.1} parent=1 // pred_fallthru
      _
    // Predicated region
    $region22: #{tpu_custom_call.1} parent=1 // pred_check
      _
    $region23: #{tpu_custom_call.1} parent=1 // pred_check_branch
      %54 = sbr.rel (0) target = $region25
    $region24: #{tpu_custom_call.1} parent=1 // pred_region
      %55 = dma.done [#allocation6], 512
    $region25: #{tpu_custom_call.1} parent=1 // pred_fallthru
      _
    // Predicated region
    $region26: #{tpu_custom_call.1} parent=1 // pred_check
      _
    $region27: #{tpu_custom_call.1} parent=1 // pred_check_branch
      %57 = sbr.rel (0) target = $region29
    $region28: #{tpu_custom_call.1} parent=1 // pred_region
      %58 = dma.done [#allocation6], 1024
    $region29: #{tpu_custom_call.1} parent=1 // pred_fallthru
      _
    %p59 = scmp.eq.s32.totalorder 0, 0
    // Predicated region
    $region30: #{tpu_custom_call.1} parent=1 // pred_check
      %p60 = pneg %p59
    $region31: #{tpu_custom_call.1} parent=1 // pred_check_branch
      %62 = sbr.rel (%p60) target = $region33
    $region32: #{tpu_custom_call.1} parent=1 // pred_region
      %63 = vst [vmem:[#allocation8] sm:$0xff] 0.0
    $region33: #{tpu_custom_call.1} parent=1 // pred_fallthru
      _
    %v64 = vld [vmem:[#allocation8] sm:$0xff]
    %v65 = vld [vmem:[#allocation5] sm:$0xff]
    %v66 = vld [vmem:[#allocation5 + $0x8] sm:$0xff]
    %v67 = vld [vmem:[#allocation5 + $0x10] sm:$0xff]
    %v68 = vld [vmem:[#allocation5 + $0x18] sm:$0xff]
    %v69 = vld [vmem:[#allocation7] sm:$0xff]
    %v70 = vld [vmem:[#allocation7 + $0x8] sm:$0xff]
    %v71 = vld [vmem:[#allocation7 + $0x10] sm:$0xff]
    %v72 = vld [vmem:[#allocation7 + $0x18] sm:$0xff]
    %v73 = vld [vmem:[#allocation7 + $0x20] sm:$0xff]
    %v74 = vld [vmem:[#allocation7 + $0x28] sm:$0xff]
    %v75 = vld [vmem:[#allocation7 + $0x30] sm:$0xff]
    %v76 = vld [vmem:[#allocation7 + $0x38] sm:$0xff]
    %v77 = vld [vmem:[%s3] sm:$0x1]
    %v79 = vlaneseq
    %v80 = vshrl.u32 %v79, 7
    %v81 = vsub.s32 0, %v80
    %v82 = vrot.slane %v77, %v81
    %v84 = vld [vmem:[#allocation2] sm:$0xff]
    %vm85 = vcmask 261120
    %v87 = vsel %vm85, %v64, 0
    %89 = vmatprep.subr.mxu0 0.0
    %90 = vmatpush1.msra.mxu0 %v65
    %91 = vmatprep.subr.mxu0 0.0
    %92 = vmatpush1.msra.mxu0 %v66
    %93 = vmatprep.subr.mxu0 0.0
    %94 = vmatpush1.msra.mxu0 %v67
    %95 = vmatprep.subr.mxu0 0.0
    %96 = vmatpush1.msra.mxu0 %v68
    %97 = vmatprep.subr.mxu0 0.0
    %98 = vmatpush1.msra.mxu0 0.0
    %99 = vmatprep.subr.mxu0 0.0
    %100 = vmatpush1.msra.mxu0 0.0
    %101 = vmatprep.subr.mxu0 0.0
    %102 = vmatpush1.msra.mxu0 0.0
    %103 = vmatprep.subr.mxu0 0.0
    %104 = vmatpush1.msra.mxu0 0.0
    %105 = vmatprep.subr.mxu0 0.0
    %106 = vmatpush1.msra.mxu0 0.0
    %107 = vmatprep.subr.mxu0 0.0
    %108 = vmatpush1.msra.mxu0 0.0
    %109 = vmatprep.subr.mxu0 0.0
    %110 = vmatpush1.msra.mxu0 0.0
    %111 = vmatprep.subr.mxu0 0.0
    %112 = vmatpush1.msra.mxu0 0.0
    %113 = vmatprep.subr.mxu0 0.0
    %114 = vmatpush1.msra.mxu0 0.0
    %115 = vmatprep.subr.mxu0 0.0
    %116 = vmatpush1.msra.mxu0 0.0
    %117 = vmatprep.subr.mxu0 0.0
    %118 = vmatpush1.msra.mxu0 0.0
    %119 = vmatprep.subr.mxu0 0.0
    %120 = vmatpush1.msra.mxu0 0.0
    %121 = vmatprep.subr.mxu0 0.0
    %122 = vmatpush1.msra.mxu0 0.0
    %123 = vmatprep.subr.mxu0 0.0
    %124 = vmatpush1.msra.mxu0 0.0
    %125 = vmatprep.subr.mxu0 0.0
    %126 = vmatpush1.msra.mxu0 0.0
    %127 = vmatprep.subr.mxu0 0.0
    %128 = vmatpush1.msra.mxu0 0.0
    %129 = vmatprep.subr.mxu0 0.0
    %130 = vmatpush1.msra.mxu0 0.0
    %131 = vmatprep.subr.mxu0 0.0
    %132 = vmatpush1.msra.mxu0 0.0
    %133 = vmatprep.subr.mxu0 0.0
    %134 = vmatpush1.msra.mxu0 0.0
    %135 = vmatprep.subr.mxu0 0.0
    %136 = vmatpush1.msra.mxu0 0.0
    %137 = vmatprep.subr.mxu0 0.0
    %138 = vmatpush1.msra.mxu0 0.0
    %139 = vmatprep.subr.mxu0 0.0
    %140 = vmatpush1.msra.mxu0 0.0
    %141 = vmatprep.subr.mxu0 0.0
    %142 = vmatpush1.msra.mxu0 0.0
    %143 = vmatprep.subr.mxu0 0.0
    %144 = vmatpush1.msra.mxu0 0.0
    %145 = vmatprep.subr.mxu0 0.0
    %146 = vmatpush1.msra.mxu0 0.0
    %147 = vmatprep.subr.mxu0 0.0
    %148 = vmatpush1.msra.mxu0 0.0
    %149 = vmatprep.subr.mxu0 0.0
    %150 = vmatpush1.msra.mxu0 0.0
    %151 = vmatprep.subr.mxu0 0.0
    %152 = vmatpush1.msra.mxu0 0.0
    %153 = vmatprep.mubr.f32.mxu0 0.0
    %154 = vmatmul.mubr.f32.gmra.mrb[0].mxu0 %v87
    %v155 = vpop.f32.mrb[0].mxu0
    %v156 = vadd.f32 0.0, %v155
    %v157 = vpop.f32.mrb[0].mxu0
    %158 = vdwg.mxu0
    %v159 = vadd.f32 %v84, %v156
    %v160 = vmul.f32 %v159, 0.5
    %v161 = vtanh.pop %v160
    %v162 = vmul.f32 %v161, 0.5
    %v163 = vadd.f32 %v162, 0.5
    %v164 = vtanh.pop %v159
    %165 = vrot.lane.b32.xlu0 %v64, 96
    %v166 = vpop.permute.xlu0 %165
    %v168 = vmul.f32 %v163, %v166
    %170 = vrot.lane.b32.xlu0 %v164, 64
    %v171 = vpop.permute.xlu0 %170
    %v173 = vmul.f32 %v163, %v171
    %175 = vrot.lane.b32.xlu0 %v173, 32
    %v176 = vpop.permute.xlu0 %175
    %v178 = vadd.f32 %v168, %v176
    %v179 = vtanh.pop %v178
    %181 = vrot.lane.b32.xlu0 %v179, 64
    %v182 = vpop.permute.xlu0 %181
    %v184 = vmul.f32 %v163, %v182
    %186 = vrot.lane.b32.xlu0 %v184, 32
    %v187 = vpop.permute.xlu0 %186
    %v189 = vsel %vm85, %v187, %v64
    %vm190 = vcmask 523264
    %v192 = vsel %vm190, %v189, 0
    %194 = vmatprep.subr.mxu0 0.0
    %195 = vmatpush1.msra.mxu0 %v69
    %196 = vmatprep.subr.mxu0 0.0
    %197 = vmatpush1.msra.mxu0 %v70
    %198 = vmatprep.subr.mxu0 0.0
    %199 = vmatpush1.msra.mxu0 %v71
    %200 = vmatprep.subr.mxu0 0.0
    %201 = vmatpush1.msra.mxu0 %v72
    %202 = vmatprep.subr.mxu0 0.0
    %203 = vmatpush1.msra.mxu0 %v73
    %204 = vmatprep.subr.mxu0 0.0
    %205 = vmatpush1.msra.mxu0 %v74
    %206 = vmatprep.subr.mxu0 0.0
    %207 = vmatpush1.msra.mxu0 %v75
    %208 = vmatprep.subr.mxu0 0.0
    %209 = vmatpush1.msra.mxu0 %v76
    %210 = vmatprep.subr.mxu0 0.0
    %211 = vmatpush1.msra.mxu0 0.0
    %212 = vmatprep.subr.mxu0 0.0
    %213 = vmatpush1.msra.mxu0 0.0
    %214 = vmatprep.subr.mxu0 0.0
    %215 = vmatpush1.msra.mxu0 0.0
    %216 = vmatprep.subr.mxu0 0.0
    %217 = vmatpush1.msra.mxu0 0.0
    %218 = vmatprep.subr.mxu0 0.0
    %219 = vmatpush1.msra.mxu0 0.0
    %220 = vmatprep.subr.mxu0 0.0
    %221 = vmatpush1.msra.mxu0 0.0
    %222 = vmatprep.subr.mxu0 0.0
    %223 = vmatpush1.msra.mxu0 0.0
    %224 = vmatprep.subr.mxu0 0.0
    %225 = vmatpush1.msra.mxu0 0.0
    %226 = vmatprep.subr.mxu0 0.0
    %227 = vmatpush1.msra.mxu0 0.0
    %228 = vmatprep.subr.mxu0 0.0
    %229 = vmatpush1.msra.mxu0 0.0
    %230 = vmatprep.subr.mxu0 0.0
    %231 = vmatpush1.msra.mxu0 0.0
    %232 = vmatprep.subr.mxu0 0.0
    %233 = vmatpush1.msra.mxu0 0.0
    %234 = vmatprep.subr.mxu0 0.0
    %235 = vmatpush1.msra.mxu0 0.0
    %236 = vmatprep.subr.mxu0 0.0
    %237 = vmatpush1.msra.mxu0 0.0
    %238 = vmatprep.subr.mxu0 0.0
    %239 = vmatpush1.msra.mxu0 0.0
    %240 = vmatprep.subr.mxu0 0.0
    %241 = vmatpush1.msra.mxu0 0.0
    %242 = vmatprep.subr.mxu0 0.0
    %243 = vmatpush1.msra.mxu0 0.0
    %244 = vmatprep.subr.mxu0 0.0
    %245 = vmatpush1.msra.mxu0 0.0
    %246 = vmatprep.subr.mxu0 0.0
    %247 = vmatpush1.msra.mxu0 0.0
    %248 = vmatprep.subr.mxu0 0.0
    %249 = vmatpush1.msra.mxu0 0.0
    %250 = vmatprep.subr.mxu0 0.0
    %251 = vmatpush1.msra.mxu0 0.0
    %252 = vmatprep.subr.mxu0 0.0
    %253 = vmatpush1.msra.mxu0 0.0
    %254 = vmatprep.subr.mxu0 0.0
    %255 = vmatpush1.msra.mxu0 0.0
    %256 = vmatprep.subr.mxu0 0.0
    %257 = vmatpush1.msra.mxu0 0.0
    %258 = vmatprep.mubr.f32.mxu0 0.0
    %259 = vmatmul.mubr.f32.gmra.mrb[0].mxu0 %v192
    %v260 = vpop.f32.mrb[0].mxu0
    %v261 = vadd.f32 %v82, %v260
    %v262 = vpop.f32.mrb[0].mxu0
    %263 = vdwg.mxu0
    %v264 = vmul.f32 %v261, 0.5
    %v265 = vtanh.pop %v264
    %v266 = vmul.f32 %v265, 0.5
    %v267 = vadd.f32 %v266, 0.5
    %v268 = vtanh.pop %v261
    %269 = vrot.lane.b32.xlu0 %v64, 64
    %v270 = vpop.permute.xlu0 %269
    %v272 = vmul.f32 %v267, %v270
    %274 = vrot.lane.b32.xlu0 %v268, 64
    %v275 = vpop.permute.xlu0 %274
    %v277 = vmul.f32 %v267, %v275
    %279 = vrot.lane.b32.xlu0 %v277, 32
    %v280 = vpop.permute.xlu0 %279
    %v282 = vadd.f32 %v272, %v280
    %v283 = vtanh.pop %v282
    %285 = vrot.lane.b32.xlu0 %v283, 64
    %v286 = vpop.permute.xlu0 %285
    %v288 = vmul.f32 %v267, %v286
    %s289 = scalar_lea.vmem [#allocation2], 8
    %v290 = vld [vmem:[%s289] sm:$0xff]
    %v291 = vsel %vm85, %v187, 0
    %293 = vmatprep.subr.mxu0 0.0
    %294 = vmatpush1.msra.mxu0 %v65
    %295 = vmatprep.subr.mxu0 0.0
    %296 = vmatpush1.msra.mxu0 %v66
    %297 = vmatprep.subr.mxu0 0.0
    %298 = vmatpush1.msra.mxu0 %v67
    %299 = vmatprep.subr.mxu0 0.0
    %300 = vmatpush1.msra.mxu0 %v68
    %301 = vmatprep.subr.mxu0 0.0
    %302 = vmatpush1.msra.mxu0 0.0
    %303 = vmatprep.subr.mxu0 0.0
    %304 = vmatpush1.msra.mxu0 0.0
    %305 = vmatprep.subr.mxu0 0.0
    %306 = vmatpush1.msra.mxu0 0.0
    %307 = vmatprep.subr.mxu0 0.0
    %308 = vmatpush1.msra.mxu0 0.0
    %309 = vmatprep.subr.mxu0 0.0
    %310 = vmatpush1.msra.mxu0 0.0
    %311 = vmatprep.subr.mxu0 0.0
    %312 = vmatpush1.msra.mxu0 0.0
    %313 = vmatprep.subr.mxu0 0.0
    %314 = vmatpush1.msra.mxu0 0.0
    %315 = vmatprep.subr.mxu0 0.0
    %316 = vmatpush1.msra.mxu0 0.0
    %317 = vmatprep.subr.mxu0 0.0
    %318 = vmatpush1.msra.mxu0 0.0
    %319 = vmatprep.subr.mxu0 0.0
    %320 = vmatpush1.msra.mxu0 0.0
    %321 = vmatprep.subr.mxu0 0.0
    %322 = vmatpush1.msra.mxu0 0.0
    %323 = vmatprep.subr.mxu0 0.0
    %324 = vmatpush1.msra.mxu0 0.0
    %325 = vmatprep.subr.mxu0 0.0
    %326 = vmatpush1.msra.mxu0 0.0
    %327 = vmatprep.subr.mxu0 0.0
    %328 = vmatpush1.msra.mxu0 0.0
    %329 = vmatprep.subr.mxu0 0.0
    %330 = vmatpush1.msra.mxu0 0.0
    %331 = vmatprep.subr.mxu0 0.0
    %332 = vmatpush1.msra.mxu0 0.0
    %333 = vmatprep.subr.mxu0 0.0
    %334 = vmatpush1.msra.mxu0 0.0
    %335 = vmatprep.subr.mxu0 0.0
    %336 = vmatpush1.msra.mxu0 0.0
    %337 = vmatprep.subr.mxu0 0.0
    %338 = vmatpush1.msra.mxu0 0.0
    %339 = vmatprep.subr.mxu0 0.0
    %340 = vmatpush1.msra.mxu0 0.0
    %341 = vmatprep.subr.mxu0 0.0
    %342 = vmatpush1.msra.mxu0 0.0
    %343 = vmatprep.subr.mxu0 0.0
    %344 = vmatpush1.msra.mxu0 0.0
    %345 = vmatprep.subr.mxu0 0.0
    %346 = vmatpush1.msra.mxu0 0.0
    %347 = vmatprep.subr.mxu0 0.0
    %348 = vmatpush1.msra.mxu0 0.0
    %349 = vmatprep.subr.mxu0 0.0
    %350 = vmatpush1.msra.mxu0 0.0
    %351 = vmatprep.subr.mxu0 0.0
    %352 = vmatpush1.msra.mxu0 0.0
    %353 = vmatprep.subr.mxu0 0.0
    %354 = vmatpush1.msra.mxu0 0.0
    %355 = vmatprep.subr.mxu0 0.0
    %356 = vmatpush1.msra.mxu0 0.0
    %357 = vmatprep.mubr.f32.mxu0 0.0
    %358 = vmatmul.mubr.f32.gmra.mrb[0].mxu0 %v291
    %v359 = vpop.f32.mrb[0].mxu0
    %v360 = vadd.f32 0.0, %v359
    %v361 = vpop.f32.mrb[0].mxu0
    %362 = vdwg.mxu0
    %v363 = vadd.f32 %v290, %v360
    %v364 = vmul.f32 %v363, 0.5
    %v365 = vtanh.pop %v364
    %v366 = vmul.f32 %v365, 0.5
    %v367 = vadd.f32 %v366, 0.5
    %v368 = vtanh.pop %v363
    %v369 = vmul.f32 %v367, %v178
    %371 = vrot.lane.b32.xlu0 %v368, 64
    %v372 = vpop.permute.xlu0 %371
    %v374 = vmul.f32 %v367, %v372
    %376 = vrot.lane.b32.xlu0 %v374, 32
    %v377 = vpop.permute.xlu0 %376
    %v379 = vadd.f32 %v369, %v377
    %v380 = vtanh.pop %v379
    %382 = vrot.lane.b32.xlu0 %v380, 64
    %v383 = vpop.permute.xlu0 %382
    %v385 = vmul.f32 %v367, %v383
    %387 = vrot.lane.b32.xlu0 %v385, 32
    %v388 = vpop.permute.xlu0 %387
    %391 = vrot.lane.b32.xlu0 %v288, 64
    %v392 = vpop.permute.xlu0 %391
    %v394 = vsel %vm85, %v388, %v392
    %v396 = vsel %vm190, %v394, 0
    %398 = vmatprep.subr.mxu0 0.0
    %399 = vmatpush1.msra.mxu0 %v69
    %400 = vmatprep.subr.mxu0 0.0
    %401 = vmatpush1.msra.mxu0 %v70
    %402 = vmatprep.subr.mxu0 0.0
    %403 = vmatpush1.msra.mxu0 %v71
    %404 = vmatprep.subr.mxu0 0.0
    %405 = vmatpush1.msra.mxu0 %v72
    %406 = vmatprep.subr.mxu0 0.0
    %407 = vmatpush1.msra.mxu0 %v73
    %408 = vmatprep.subr.mxu0 0.0
    %409 = vmatpush1.msra.mxu0 %v74
    %410 = vmatprep.subr.mxu0 0.0
    %411 = vmatpush1.msra.mxu0 %v75
    %412 = vmatprep.subr.mxu0 0.0
    %413 = vmatpush1.msra.mxu0 %v76
    %414 = vmatprep.subr.mxu0 0.0
    %415 = vmatpush1.msra.mxu0 0.0
    %416 = vmatprep.subr.mxu0 0.0
    %417 = vmatpush1.msra.mxu0 0.0
    %418 = vmatprep.subr.mxu0 0.0
    %419 = vmatpush1.msra.mxu0 0.0
    %420 = vmatprep.subr.mxu0 0.0
    %421 = vmatpush1.msra.mxu0 0.0
    %422 = vmatprep.subr.mxu0 0.0
    %423 = vmatpush1.msra.mxu0 0.0
    %424 = vmatprep.subr.mxu0 0.0
    %425 = vmatpush1.msra.mxu0 0.0
    %426 = vmatprep.subr.mxu0 0.0
    %427 = vmatpush1.msra.mxu0 0.0
    %428 = vmatprep.subr.mxu0 0.0
    %429 = vmatpush1.msra.mxu0 0.0
    %430 = vmatprep.subr.mxu0 0.0
    %431 = vmatpush1.msra.mxu0 0.0
    %432 = vmatprep.subr.mxu0 0.0
    %433 = vmatpush1.msra.mxu0 0.0
    %434 = vmatprep.subr.mxu0 0.0
    %435 = vmatpush1.msra.mxu0 0.0
    %436 = vmatprep.subr.mxu0 0.0
    %437 = vmatpush1.msra.mxu0 0.0
    %438 = vmatprep.subr.mxu0 0.0
    %439 = vmatpush1.msra.mxu0 0.0
    %440 = vmatprep.subr.mxu0 0.0
    %441 = vmatpush1.msra.mxu0 0.0
    %442 = vmatprep.subr.mxu0 0.0
    %443 = vmatpush1.msra.mxu0 0.0
    %444 = vmatprep.subr.mxu0 0.0
    %445 = vmatpush1.msra.mxu0 0.0
    %446 = vmatprep.subr.mxu0 0.0
    %447 = vmatpush1.msra.mxu0 0.0
    %448 = vmatprep.subr.mxu0 0.0
    %449 = vmatpush1.msra.mxu0 0.0
    %450 = vmatprep.subr.mxu0 0.0
    %451 = vmatpush1.msra.mxu0 0.0
    %452 = vmatprep.subr.mxu0 0.0
    %453 = vmatpush1.msra.mxu0 0.0
    %454 = vmatprep.subr.mxu0 0.0
    %455 = vmatpush1.msra.mxu0 0.0
    %456 = vmatprep.subr.mxu0 0.0
    %457 = vmatpush1.msra.mxu0 0.0
    %458 = vmatprep.subr.mxu0 0.0
    %459 = vmatpush1.msra.mxu0 0.0
    %460 = vmatprep.subr.mxu0 0.0
    %461 = vmatpush1.msra.mxu0 0.0
    %462 = vmatprep.mubr.f32.mxu0 0.0
    %463 = vmatmul.mubr.f32.gmra.mrb[0].mxu0 %v396
    %v464 = vpop.f32.mrb[0].mxu0
    %v465 = vadd.f32 %v82, %v464
    %v466 = vpop.f32.mrb[0].mxu0
    %467 = vdwg.mxu0
    %v468 = vmul.f32 %v465, 0.5
    %v469 = vtanh.pop %v468
    %v470 = vmul.f32 %v469, 0.5
    %v471 = vadd.f32 %v470, 0.5
    %v472 = vtanh.pop %v465
    %v473 = vmul.f32 %v471, %v282
    %475 = vrot.lane.b32.xlu0 %v472, 64
    %v476 = vpop.permute.xlu0 %475
    %v478 = vmul.f32 %v471, %v476
    %480 = vrot.lane.b32.xlu0 %v478, 32
    %v481 = vpop.permute.xlu0 %480
    %v483 = vadd.f32 %v473, %v481
    %v484 = vtanh.pop %v483
    %486 = vrot.lane.b32.xlu0 %v484, 64
    %v487 = vpop.permute.xlu0 %486
    %v489 = vmul.f32 %v471, %v487
    %s490 = scalar_lea.vmem [#allocation2], 16
    %v491 = vld [vmem:[%s490] sm:$0xff]
    %v492 = vsel %vm85, %v388, 0
    %494 = vmatprep.subr.mxu0 0.0
    %495 = vmatpush1.msra.mxu0 %v65
    %496 = vmatprep.subr.mxu0 0.0
    %497 = vmatpush1.msra.mxu0 %v66
    %498 = vmatprep.subr.mxu0 0.0
    %499 = vmatpush1.msra.mxu0 %v67
    %500 = vmatprep.subr.mxu0 0.0
    %501 = vmatpush1.msra.mxu0 %v68
    %502 = vmatprep.subr.mxu0 0.0
    %503 = vmatpush1.msra.mxu0 0.0
    %504 = vmatprep.subr.mxu0 0.0
    %505 = vmatpush1.msra.mxu0 0.0
    %506 = vmatprep.subr.mxu0 0.0
    %507 = vmatpush1.msra.mxu0 0.0
    %508 = vmatprep.subr.mxu0 0.0
    %509 = vmatpush1.msra.mxu0 0.0
    %510 = vmatprep.subr.mxu0 0.0
    %511 = vmatpush1.msra.mxu0 0.0
    %512 = vmatprep.subr.mxu0 0.0
    %513 = vmatpush1.msra.mxu0 0.0
    %514 = vmatprep.subr.mxu0 0.0
    %515 = vmatpush1.msra.mxu0 0.0
    %516 = vmatprep.subr.mxu0 0.0
    %517 = vmatpush1.msra.mxu0 0.0
    %518 = vmatprep.subr.mxu0 0.0
    %519 = vmatpush1.msra.mxu0 0.0
    %520 = vmatprep.subr.mxu0 0.0
    %521 = vmatpush1.msra.mxu0 0.0
    %522 = vmatprep.subr.mxu0 0.0
    %523 = vmatpush1.msra.mxu0 0.0
    %524 = vmatprep.subr.mxu0 0.0
    %525 = vmatpush1.msra.mxu0 0.0
    %526 = vmatprep.subr.mxu0 0.0
    %527 = vmatpush1.msra.mxu0 0.0
    %528 = vmatprep.subr.mxu0 0.0
    %529 = vmatpush1.msra.mxu0 0.0
    %530 = vmatprep.subr.mxu0 0.0
    %531 = vmatpush1.msra.mxu0 0.0
    %532 = vmatprep.subr.mxu0 0.0
    %533 = vmatpush1.msra.mxu0 0.0
    %534 = vmatprep.subr.mxu0 0.0
    %535 = vmatpush1.msra.mxu0 0.0
    %536 = vmatprep.subr.mxu0 0.0
    %537 = vmatpush1.msra.mxu0 0.0
    %538 = vmatprep.subr.mxu0 0.0
    %539 = vmatpush1.msra.mxu0 0.0
    %540 = vmatprep.subr.mxu0 0.0
    %541 = vmatpush1.msra.mxu0 0.0
    %542 = vmatprep.subr.mxu0 0.0
    %543 = vmatpush1.msra.mxu0 0.0
    %544 = vmatprep.subr.mxu0 0.0
    %545 = vmatpush1.msra.mxu0 0.0
    %546 = vmatprep.subr.mxu0 0.0
    %547 = vmatpush1.msra.mxu0 0.0
    %548 = vmatprep.subr.mxu0 0.0
    %549 = vmatpush1.msra.mxu0 0.0
    %550 = vmatprep.subr.mxu0 0.0
    %551 = vmatpush1.msra.mxu0 0.0
    %552 = vmatprep.subr.mxu0 0.0
    %553 = vmatpush1.msra.mxu0 0.0
    %554 = vmatprep.subr.mxu0 0.0
    %555 = vmatpush1.msra.mxu0 0.0
    %556 = vmatprep.subr.mxu0 0.0
    %557 = vmatpush1.msra.mxu0 0.0
    %558 = vmatprep.mubr.f32.mxu0 0.0
    %559 = vmatmul.mubr.f32.gmra.mrb[0].mxu0 %v492
    %v560 = vpop.f32.mrb[0].mxu0
    %v561 = vadd.f32 0.0, %v560
    %v562 = vpop.f32.mrb[0].mxu0
    %563 = vdwg.mxu0
    %v564 = vadd.f32 %v491, %v561
    %v565 = vmul.f32 %v564, 0.5
    %v566 = vtanh.pop %v565
    %v567 = vmul.f32 %v566, 0.5
    %v568 = vadd.f32 %v567, 0.5
    %v569 = vtanh.pop %v564
    %v570 = vmul.f32 %v568, %v379
    %572 = vrot.lane.b32.xlu0 %v569, 64
    %v573 = vpop.permute.xlu0 %572
    %v575 = vmul.f32 %v568, %v573
    %577 = vrot.lane.b32.xlu0 %v575, 32
    %v578 = vpop.permute.xlu0 %577
    %v580 = vadd.f32 %v570, %v578
    %v581 = vtanh.pop %v580
    %583 = vrot.lane.b32.xlu0 %v581, 64
    %v584 = vpop.permute.xlu0 %583
    %v586 = vmul.f32 %v568, %v584
    %588 = vrot.lane.b32.xlu0 %v586, 32
    %v589 = vpop.permute.xlu0 %588
    %592 = vrot.lane.b32.xlu0 %v489, 64
    %v593 = vpop.permute.xlu0 %592
    %v595 = vsel %vm85, %v589, %v593
    %v597 = vsel %vm190, %v595, 0
    %599 = vmatprep.subr.mxu0 0.0
    %600 = vmatpush1.msra.mxu0 %v69
    %601 = vmatprep.subr.mxu0 0.0
    %602 = vmatpush1.msra.mxu0 %v70
    %603 = vmatprep.subr.mxu0 0.0
    %604 = vmatpush1.msra.mxu0 %v71
    %605 = vmatprep.subr.mxu0 0.0
    %606 = vmatpush1.msra.mxu0 %v72
    %607 = vmatprep.subr.mxu0 0.0
    %608 = vmatpush1.msra.mxu0 %v73
    %609 = vmatprep.subr.mxu0 0.0
    %610 = vmatpush1.msra.mxu0 %v74
    %611 = vmatprep.subr.mxu0 0.0
    %612 = vmatpush1.msra.mxu0 %v75
    %613 = vmatprep.subr.mxu0 0.0
    %614 = vmatpush1.msra.mxu0 %v76
    %615 = vmatprep.subr.mxu0 0.0
    %616 = vmatpush1.msra.mxu0 0.0
    %617 = vmatprep.subr.mxu0 0.0
    %618 = vmatpush1.msra.mxu0 0.0
    %619 = vmatprep.subr.mxu0 0.0
    %620 = vmatpush1.msra.mxu0 0.0
    %621 = vmatprep.subr.mxu0 0.0
    %622 = vmatpush1.msra.mxu0 0.0
    %623 = vmatprep.subr.mxu0 0.0
    %624 = vmatpush1.msra.mxu0 0.0
    %625 = vmatprep.subr.mxu0 0.0
    %626 = vmatpush1.msra.mxu0 0.0
    %627 = vmatprep.subr.mxu0 0.0
    %628 = vmatpush1.msra.mxu0 0.0
    %629 = vmatprep.subr.mxu0 0.0
    %630 = vmatpush1.msra.mxu0 0.0
    %631 = vmatprep.subr.mxu0 0.0
    %632 = vmatpush1.msra.mxu0 0.0
    %633 = vmatprep.subr.mxu0 0.0
    %634 = vmatpush1.msra.mxu0 0.0
    %635 = vmatprep.subr.mxu0 0.0
    %636 = vmatpush1.msra.mxu0 0.0
    %637 = vmatprep.subr.mxu0 0.0
    %638 = vmatpush1.msra.mxu0 0.0
    %639 = vmatprep.subr.mxu0 0.0
    %640 = vmatpush1.msra.mxu0 0.0
    %641 = vmatprep.subr.mxu0 0.0
    %642 = vmatpush1.msra.mxu0 0.0
    %643 = vmatprep.subr.mxu0 0.0
    %644 = vmatpush1.msra.mxu0 0.0
    %645 = vmatprep.subr.mxu0 0.0
    %646 = vmatpush1.msra.mxu0 0.0
    %647 = vmatprep.subr.mxu0 0.0
    %648 = vmatpush1.msra.mxu0 0.0
    %649 = vmatprep.subr.mxu0 0.0
    %650 = vmatpush1.msra.mxu0 0.0
    %651 = vmatprep.subr.mxu0 0.0
    %652 = vmatpush1.msra.mxu0 0.0
    %653 = vmatprep.subr.mxu0 0.0
    %654 = vmatpush1.msra.mxu0 0.0
    %655 = vmatprep.subr.mxu0 0.0
    %656 = vmatpush1.msra.mxu0 0.0
    %657 = vmatprep.subr.mxu0 0.0
    %658 = vmatpush1.msra.mxu0 0.0
    %659 = vmatprep.subr.mxu0 0.0
    %660 = vmatpush1.msra.mxu0 0.0
    %661 = vmatprep.subr.mxu0 0.0
    %662 = vmatpush1.msra.mxu0 0.0
    %663 = vmatprep.mubr.f32.mxu0 0.0
    %664 = vmatmul.mubr.f32.gmra.mrb[0].mxu0 %v597
    %v665 = vpop.f32.mrb[0].mxu0
    %v666 = vadd.f32 %v82, %v665
    %v667 = vpop.f32.mrb[0].mxu0
    %668 = vdwg.mxu0
    %v669 = vmul.f32 %v666, 0.5
    %v670 = vtanh.pop %v669
    %v671 = vmul.f32 %v670, 0.5
    %v672 = vadd.f32 %v671, 0.5
    %v673 = vtanh.pop %v666
    %v674 = vmul.f32 %v672, %v483
    %676 = vrot.lane.b32.xlu0 %v673, 64
    %v677 = vpop.permute.xlu0 %676
    %v679 = vmul.f32 %v672, %v677
    %681 = vrot.lane.b32.xlu0 %v679, 32
    %v682 = vpop.permute.xlu0 %681
    %v684 = vadd.f32 %v674, %v682
    %v685 = vtanh.pop %v684
    %687 = vrot.lane.b32.xlu0 %v685, 64
    %v688 = vpop.permute.xlu0 %687
    %v690 = vmul.f32 %v672, %v688
    %s691 = scalar_lea.vmem [#allocation2], 24
    %v692 = vld [vmem:[%s691] sm:$0xff]
    %v693 = vsel %vm85, %v589, 0
    %695 = vmatprep.subr.mxu0 0.0
    %696 = vmatpush1.msra.mxu0 %v65
    %697 = vmatprep.subr.mxu0 0.0
    %698 = vmatpush1.msra.mxu0 %v66
    %699 = vmatprep.subr.mxu0 0.0
    %700 = vmatpush1.msra.mxu0 %v67
    %701 = vmatprep.subr.mxu0 0.0
    %702 = vmatpush1.msra.mxu0 %v68
    %703 = vmatprep.subr.mxu0 0.0
    %704 = vmatpush1.msra.mxu0 0.0
    %705 = vmatprep.subr.mxu0 0.0
    %706 = vmatpush1.msra.mxu0 0.0
    %707 = vmatprep.subr.mxu0 0.0
    %708 = vmatpush1.msra.mxu0 0.0
    %709 = vmatprep.subr.mxu0 0.0
    %710 = vmatpush1.msra.mxu0 0.0
    %711 = vmatprep.subr.mxu0 0.0
    %712 = vmatpush1.msra.mxu0 0.0
    %713 = vmatprep.subr.mxu0 0.0
    %714 = vmatpush1.msra.mxu0 0.0
    %715 = vmatprep.subr.mxu0 0.0
    %716 = vmatpush1.msra.mxu0 0.0
    %717 = vmatprep.subr.mxu0 0.0
    %718 = vmatpush1.msra.mxu0 0.0
    %719 = vmatprep.subr.mxu0 0.0
    %720 = vmatpush1.msra.mxu0 0.0
    %721 = vmatprep.subr.mxu0 0.0
    %722 = vmatpush1.msra.mxu0 0.0
    %723 = vmatprep.subr.mxu0 0.0
    %724 = vmatpush1.msra.mxu0 0.0
    %725 = vmatprep.subr.mxu0 0.0
    %726 = vmatpush1.msra.mxu0 0.0
    %727 = vmatprep.subr.mxu0 0.0
    %728 = vmatpush1.msra.mxu0 0.0
    %729 = vmatprep.subr.mxu0 0.0
    %730 = vmatpush1.msra.mxu0 0.0
    %731 = vmatprep.subr.mxu0 0.0
    %732 = vmatpush1.msra.mxu0 0.0
    %733 = vmatprep.subr.mxu0 0.0
    %734 = vmatpush1.msra.mxu0 0.0
    %735 = vmatprep.subr.mxu0 0.0
    %736 = vmatpush1.msra.mxu0 0.0
    %737 = vmatprep.subr.mxu0 0.0
    %738 = vmatpush1.msra.mxu0 0.0
    %739 = vmatprep.subr.mxu0 0.0
    %740 = vmatpush1.msra.mxu0 0.0
    %741 = vmatprep.subr.mxu0 0.0
    %742 = vmatpush1.msra.mxu0 0.0
    %743 = vmatprep.subr.mxu0 0.0
    %744 = vmatpush1.msra.mxu0 0.0
    %745 = vmatprep.subr.mxu0 0.0
    %746 = vmatpush1.msra.mxu0 0.0
    %747 = vmatprep.subr.mxu0 0.0
    %748 = vmatpush1.msra.mxu0 0.0
    %749 = vmatprep.subr.mxu0 0.0
    %750 = vmatpush1.msra.mxu0 0.0
    %751 = vmatprep.subr.mxu0 0.0
    %752 = vmatpush1.msra.mxu0 0.0
    %753 = vmatprep.subr.mxu0 0.0
    %754 = vmatpush1.msra.mxu0 0.0
    %755 = vmatprep.subr.mxu0 0.0
    %756 = vmatpush1.msra.mxu0 0.0
    %757 = vmatprep.subr.mxu0 0.0
    %758 = vmatpush1.msra.mxu0 0.0
    %759 = vmatprep.mubr.f32.mxu0 0.0
    %760 = vmatmul.mubr.f32.gmra.mrb[0].mxu0 %v693
    %v761 = vpop.f32.mrb[0].mxu0
    %v762 = vadd.f32 0.0, %v761
    %v763 = vpop.f32.mrb[0].mxu0
    %764 = vdwg.mxu0
    %v765 = vadd.f32 %v692, %v762
    %v766 = vmul.f32 %v765, 0.5
    %v767 = vtanh.pop %v766
    %v768 = vmul.f32 %v767, 0.5
    %v769 = vadd.f32 %v768, 0.5
    %v770 = vtanh.pop %v765
    %v771 = vmul.f32 %v769, %v580
    %773 = vrot.lane.b32.xlu0 %v770, 64
    %v774 = vpop.permute.xlu0 %773
    %v776 = vmul.f32 %v769, %v774
    %778 = vrot.lane.b32.xlu0 %v776, 32
    %v779 = vpop.permute.xlu0 %778
    %v781 = vadd.f32 %v771, %v779
    %v782 = vtanh.pop %v781
    %784 = vrot.lane.b32.xlu0 %v782, 64
    %v785 = vpop.permute.xlu0 %784
    %v787 = vmul.f32 %v769, %v785
    %789 = vrot.lane.b32.xlu0 %v787, 32
    %v790 = vpop.permute.xlu0 %789
    %793 = vrot.lane.b32.xlu0 %v690, 64
    %v794 = vpop.permute.xlu0 %793
    %v796 = vsel %vm85, %v790, %v794
    %v798 = vsel %vm190, %v796, 0
    %800 = vmatprep.subr.mxu0 0.0
    %801 = vmatpush1.msra.mxu0 %v69
    %802 = vmatprep.subr.mxu0 0.0
    %803 = vmatpush1.msra.mxu0 %v70
    %804 = vmatprep.subr.mxu0 0.0
    %805 = vmatpush1.msra.mxu0 %v71
    %806 = vmatprep.subr.mxu0 0.0
    %807 = vmatpush1.msra.mxu0 %v72
    %808 = vmatprep.subr.mxu0 0.0
    %809 = vmatpush1.msra.mxu0 %v73
    %810 = vmatprep.subr.mxu0 0.0
    %811 = vmatpush1.msra.mxu0 %v74
    %812 = vmatprep.subr.mxu0 0.0
    %813 = vmatpush1.msra.mxu0 %v75
    %814 = vmatprep.subr.mxu0 0.0
    %815 = vmatpush1.msra.mxu0 %v76
    %816 = vmatprep.subr.mxu0 0.0
    %817 = vmatpush1.msra.mxu0 0.0
    %818 = vmatprep.subr.mxu0 0.0
    %819 = vmatpush1.msra.mxu0 0.0
    %820 = vmatprep.subr.mxu0 0.0
    %821 = vmatpush1.msra.mxu0 0.0
    %822 = vmatprep.subr.mxu0 0.0
    %823 = vmatpush1.msra.mxu0 0.0
    %824 = vmatprep.subr.mxu0 0.0
    %825 = vmatpush1.msra.mxu0 0.0
    %826 = vmatprep.subr.mxu0 0.0
    %827 = vmatpush1.msra.mxu0 0.0
    %828 = vmatprep.subr.mxu0 0.0
    %829 = vmatpush1.msra.mxu0 0.0
    %830 = vmatprep.subr.mxu0 0.0
    %831 = vmatpush1.msra.mxu0 0.0
    %832 = vmatprep.subr.mxu0 0.0
    %833 = vmatpush1.msra.mxu0 0.0
    %834 = vmatprep.subr.mxu0 0.0
    %835 = vmatpush1.msra.mxu0 0.0
    %836 = vmatprep.subr.mxu0 0.0
    %837 = vmatpush1.msra.mxu0 0.0
    %838 = vmatprep.subr.mxu0 0.0
    %839 = vmatpush1.msra.mxu0 0.0
    %840 = vmatprep.subr.mxu0 0.0
    %841 = vmatpush1.msra.mxu0 0.0
    %842 = vmatprep.subr.mxu0 0.0
    %843 = vmatpush1.msra.mxu0 0.0
    %844 = vmatprep.subr.mxu0 0.0
    %845 = vmatpush1.msra.mxu0 0.0
    %846 = vmatprep.subr.mxu0 0.0
    %847 = vmatpush1.msra.mxu0 0.0
    %848 = vmatprep.subr.mxu0 0.0
    %849 = vmatpush1.msra.mxu0 0.0
    %850 = vmatprep.subr.mxu0 0.0
    %851 = vmatpush1.msra.mxu0 0.0
    %852 = vmatprep.subr.mxu0 0.0
    %853 = vmatpush1.msra.mxu0 0.0
    %854 = vmatprep.subr.mxu0 0.0
    %855 = vmatpush1.msra.mxu0 0.0
    %856 = vmatprep.subr.mxu0 0.0
    %857 = vmatpush1.msra.mxu0 0.0
    %858 = vmatprep.subr.mxu0 0.0
    %859 = vmatpush1.msra.mxu0 0.0
    %860 = vmatprep.subr.mxu0 0.0
    %861 = vmatpush1.msra.mxu0 0.0
    %862 = vmatprep.subr.mxu0 0.0
    %863 = vmatpush1.msra.mxu0 0.0
    %864 = vmatprep.mubr.f32.mxu0 0.0
    %865 = vmatmul.mubr.f32.gmra.mrb[0].mxu0 %v798
    %v866 = vpop.f32.mrb[0].mxu0
    %v867 = vadd.f32 %v82, %v866
    %v868 = vpop.f32.mrb[0].mxu0
    %869 = vdwg.mxu0
    %v870 = vmul.f32 %v867, 0.5
    %v871 = vtanh.pop %v870
    %v872 = vmul.f32 %v871, 0.5
    %v873 = vadd.f32 %v872, 0.5
    %v874 = vtanh.pop %v867
    %v875 = vmul.f32 %v873, %v684
    %877 = vrot.lane.b32.xlu0 %v874, 64
    %v878 = vpop.permute.xlu0 %877
    %v880 = vmul.f32 %v873, %v878
    %882 = vrot.lane.b32.xlu0 %v880, 32
    %v883 = vpop.permute.xlu0 %882
    %v885 = vadd.f32 %v875, %v883
    %v886 = vtanh.pop %v885
    %888 = vrot.lane.b32.xlu0 %v886, 64
    %v889 = vpop.permute.xlu0 %888
    %v891 = vmul.f32 %v873, %v889
    %s892 = scalar_lea.vmem [#allocation2], 32
    %v893 = vld [vmem:[%s892] sm:$0xff]
    %v894 = vsel %vm85, %v790, 0
    %896 = vmatprep.subr.mxu0 0.0
    %897 = vmatpush1.msra.mxu0 %v65
    %898 = vmatprep.subr.mxu0 0.0
    %899 = vmatpush1.msra.mxu0 %v66
    %900 = vmatprep.subr.mxu0 0.0
    %901 = vmatpush1.msra.mxu0 %v67
    %902 = vmatprep.subr.mxu0 0.0
    %903 = vmatpush1.msra.mxu0 %v68
    %904 = vmatprep.subr.mxu0 0.0
    %905 = vmatpush1.msra.mxu0 0.0
    %906 = vmatprep.subr.mxu0 0.0
    %907 = vmatpush1.msra.mxu0 0.0
    %908 = vmatprep.subr.mxu0 0.0
    %909 = vmatpush1.msra.mxu0 0.0
    %910 = vmatprep.subr.mxu0 0.0
    %911 = vmatpush1.msra.mxu0 0.0
    %912 = vmatprep.subr.mxu0 0.0
    %913 = vmatpush1.msra.mxu0 0.0
    %914 = vmatprep.subr.mxu0 0.0
    %915 = vmatpush1.msra.mxu0 0.0
    %916 = vmatprep.subr.mxu0 0.0
    %917 = vmatpush1.msra.mxu0 0.0
    %918 = vmatprep.subr.mxu0 0.0
    %919 = vmatpush1.msra.mxu0 0.0
    %920 = vmatprep.subr.mxu0 0.0
    %921 = vmatpush1.msra.mxu0 0.0
    %922 = vmatprep.subr.mxu0 0.0
    %923 = vmatpush1.msra.mxu0 0.0
    %924 = vmatprep.subr.mxu0 0.0
    %925 = vmatpush1.msra.mxu0 0.0
    %926 = vmatprep.subr.mxu0 0.0
    %927 = vmatpush1.msra.mxu0 0.0
    %928 = vmatprep.subr.mxu0 0.0
    %929 = vmatpush1.msra.mxu0 0.0
    %930 = vmatprep.subr.mxu0 0.0
    %931 = vmatpush1.msra.mxu0 0.0
    %932 = vmatprep.subr.mxu0 0.0
    %933 = vmatpush1.msra.mxu0 0.0
    %934 = vmatprep.subr.mxu0 0.0
    %935 = vmatpush1.msra.mxu0 0.0
    %936 = vmatprep.subr.mxu0 0.0
    %937 = vmatpush1.msra.mxu0 0.0
    %938 = vmatprep.subr.mxu0 0.0
    %939 = vmatpush1.msra.mxu0 0.0
    %940 = vmatprep.subr.mxu0 0.0
    %941 = vmatpush1.msra.mxu0 0.0
    %942 = vmatprep.subr.mxu0 0.0
    %943 = vmatpush1.msra.mxu0 0.0
    %944 = vmatprep.subr.mxu0 0.0
    %945 = vmatpush1.msra.mxu0 0.0
    %946 = vmatprep.subr.mxu0 0.0
    %947 = vmatpush1.msra.mxu0 0.0
    %948 = vmatprep.subr.mxu0 0.0
    %949 = vmatpush1.msra.mxu0 0.0
    %950 = vmatprep.subr.mxu0 0.0
    %951 = vmatpush1.msra.mxu0 0.0
    %952 = vmatprep.subr.mxu0 0.0
    %953 = vmatpush1.msra.mxu0 0.0
    %954 = vmatprep.subr.mxu0 0.0
    %955 = vmatpush1.msra.mxu0 0.0
    %956 = vmatprep.subr.mxu0 0.0
    %957 = vmatpush1.msra.mxu0 0.0
    %958 = vmatprep.subr.mxu0 0.0
    %959 = vmatpush1.msra.mxu0 0.0
    %960 = vmatprep.mubr.f32.mxu0 0.0
    %961 = vmatmul.mubr.f32.gmra.mrb[0].mxu0 %v894
    %v962 = vpop.f32.mrb[0].mxu0
    %v963 = vadd.f32 0.0, %v962
    %v964 = vpop.f32.mrb[0].mxu0
    %965 = vdwg.mxu0
    %v966 = vadd.f32 %v893, %v963
    %v967 = vmul.f32 %v966, 0.5
    %v968 = vtanh.pop %v967
    %v969 = vmul.f32 %v968, 0.5
    %v970 = vadd.f32 %v969, 0.5
    %v971 = vtanh.pop %v966
    %v972 = vmul.f32 %v970, %v781
    %974 = vrot.lane.b32.xlu0 %v971, 64
    %v975 = vpop.permute.xlu0 %974
    %v977 = vmul.f32 %v970, %v975
    %979 = vrot.lane.b32.xlu0 %v977, 32
    %v980 = vpop.permute.xlu0 %979
    %v982 = vadd.f32 %v972, %v980
    %v983 = vtanh.pop %v982
    %985 = vrot.lane.b32.xlu0 %v983, 64
    %v986 = vpop.permute.xlu0 %985
    %v988 = vmul.f32 %v970, %v986
    %990 = vrot.lane.b32.xlu0 %v988, 32
    %v991 = vpop.permute.xlu0 %990
    %994 = vrot.lane.b32.xlu0 %v891, 64
    %v995 = vpop.permute.xlu0 %994
    %v997 = vsel %vm85, %v991, %v995
    %v999 = vsel %vm190, %v997, 0
    %1001 = vmatprep.subr.mxu0 0.0
    %1002 = vmatpush1.msra.mxu0 %v69
    %1003 = vmatprep.subr.mxu0 0.0
    %1004 = vmatpush1.msra.mxu0 %v70
    %1005 = vmatprep.subr.mxu0 0.0
    %1006 = vmatpush1.msra.mxu0 %v71
    %1007 = vmatprep.subr.mxu0 0.0
    %1008 = vmatpush1.msra.mxu0 %v72
    %1009 = vmatprep.subr.mxu0 0.0
    %1010 = vmatpush1.msra.mxu0 %v73
    %1011 = vmatprep.subr.mxu0 0.0
    %1012 = vmatpush1.msra.mxu0 %v74
    %1013 = vmatprep.subr.mxu0 0.0
    %1014 = vmatpush1.msra.mxu0 %v75
    %1015 = vmatprep.subr.mxu0 0.0
    %1016 = vmatpush1.msra.mxu0 %v76
    %1017 = vmatprep.subr.mxu0 0.0
    %1018 = vmatpush1.msra.mxu0 0.0
    %1019 = vmatprep.subr.mxu0 0.0
    %1020 = vmatpush1.msra.mxu0 0.0
    %1021 = vmatprep.subr.mxu0 0.0
    %1022 = vmatpush1.msra.mxu0 0.0
    %1023 = vmatprep.subr.mxu0 0.0
    %1024 = vmatpush1.msra.mxu0 0.0
    %1025 = vmatprep.subr.mxu0 0.0
    %1026 = vmatpush1.msra.mxu0 0.0
    %1027 = vmatprep.subr.mxu0 0.0
    %1028 = vmatpush1.msra.mxu0 0.0
    %1029 = vmatprep.subr.mxu0 0.0
    %1030 = vmatpush1.msra.mxu0 0.0
    %1031 = vmatprep.subr.mxu0 0.0
    %1032 = vmatpush1.msra.mxu0 0.0
    %1033 = vmatprep.subr.mxu0 0.0
    %1034 = vmatpush1.msra.mxu0 0.0
    %1035 = vmatprep.subr.mxu0 0.0
    %1036 = vmatpush1.msra.mxu0 0.0
    %1037 = vmatprep.subr.mxu0 0.0
    %1038 = vmatpush1.msra.mxu0 0.0
    %1039 = vmatprep.subr.mxu0 0.0
    %1040 = vmatpush1.msra.mxu0 0.0
    %1041 = vmatprep.subr.mxu0 0.0
    %1042 = vmatpush1.msra.mxu0 0.0
    %1043 = vmatprep.subr.mxu0 0.0
    %1044 = vmatpush1.msra.mxu0 0.0
    %1045 = vmatprep.subr.mxu0 0.0
    %1046 = vmatpush1.msra.mxu0 0.0
    %1047 = vmatprep.subr.mxu0 0.0
    %1048 = vmatpush1.msra.mxu0 0.0
    %1049 = vmatprep.subr.mxu0 0.0
    %1050 = vmatpush1.msra.mxu0 0.0
    %1051 = vmatprep.subr.mxu0 0.0
    %1052 = vmatpush1.msra.mxu0 0.0
    %1053 = vmatprep.subr.mxu0 0.0
    %1054 = vmatpush1.msra.mxu0 0.0
    %1055 = vmatprep.subr.mxu0 0.0
    %1056 = vmatpush1.msra.mxu0 0.0
    %1057 = vmatprep.subr.mxu0 0.0
    %1058 = vmatpush1.msra.mxu0 0.0
    %1059 = vmatprep.subr.mxu0 0.0
    %1060 = vmatpush1.msra.mxu0 0.0
    %1061 = vmatprep.subr.mxu0 0.0
    %1062 = vmatpush1.msra.mxu0 0.0
    %1063 = vmatprep.subr.mxu0 0.0
    %1064 = vmatpush1.msra.mxu0 0.0
    %1065 = vmatprep.mubr.f32.mxu0 0.0
    %1066 = vmatmul.mubr.f32.gmra.mrb[0].mxu0 %v999
    %v1067 = vpop.f32.mrb[0].mxu0
    %v1068 = vadd.f32 %v82, %v1067
    %v1069 = vpop.f32.mrb[0].mxu0
    %1070 = vdwg.mxu0
    %v1071 = vmul.f32 %v1068, 0.5
    %v1072 = vtanh.pop %v1071
    %v1073 = vmul.f32 %v1072, 0.5
    %v1074 = vadd.f32 %v1073, 0.5
    %v1075 = vtanh.pop %v1068
    %v1076 = vmul.f32 %v1074, %v885
    %1078 = vrot.lane.b32.xlu0 %v1075, 64
    %v1079 = vpop.permute.xlu0 %1078
    %v1081 = vmul.f32 %v1074, %v1079
    %1083 = vrot.lane.b32.xlu0 %v1081, 32
    %v1084 = vpop.permute.xlu0 %1083
    %v1086 = vadd.f32 %v1076, %v1084
    %v1087 = vtanh.pop %v1086
    %1089 = vrot.lane.b32.xlu0 %v1087, 64
    %v1090 = vpop.permute.xlu0 %1089
    %v1092 = vmul.f32 %v1074, %v1090
    %s1093 = scalar_lea.vmem [#allocation2], 40
    %v1094 = vld [vmem:[%s1093] sm:$0xff]
    %v1095 = vsel %vm85, %v991, 0
    %1097 = vmatprep.subr.mxu0 0.0
    %1098 = vmatpush1.msra.mxu0 %v65
    %1099 = vmatprep.subr.mxu0 0.0
    %1100 = vmatpush1.msra.mxu0 %v66
    %1101 = vmatprep.subr.mxu0 0.0
    %1102 = vmatpush1.msra.mxu0 %v67
    %1103 = vmatprep.subr.mxu0 0.0
    %1104 = vmatpush1.msra.mxu0 %v68
    %1105 = vmatprep.subr.mxu0 0.0
    %1106 = vmatpush1.msra.mxu0 0.0
    %1107 = vmatprep.subr.mxu0 0.0
    %1108 = vmatpush1.msra.mxu0 0.0
    %1109 = vmatprep.subr.mxu0 0.0
    %1110 = vmatpush1.msra.mxu0 0.0
    %1111 = vmatprep.subr.mxu0 0.0
    %1112 = vmatpush1.msra.mxu0 0.0
    %1113 = vmatprep.subr.mxu0 0.0
    %1114 = vmatpush1.msra.mxu0 0.0
    %1115 = vmatprep.subr.mxu0 0.0
    %1116 = vmatpush1.msra.mxu0 0.0
    %1117 = vmatprep.subr.mxu0 0.0
    %1118 = vmatpush1.msra.mxu0 0.0
    %1119 = vmatprep.subr.mxu0 0.0
    %1120 = vmatpush1.msra.mxu0 0.0
    %1121 = vmatprep.subr.mxu0 0.0
    %1122 = vmatpush1.msra.mxu0 0.0
    %1123 = vmatprep.subr.mxu0 0.0
    %1124 = vmatpush1.msra.mxu0 0.0
    %1125 = vmatprep.subr.mxu0 0.0
    %1126 = vmatpush1.msra.mxu0 0.0
    %1127 = vmatprep.subr.mxu0 0.0
    %1128 = vmatpush1.msra.mxu0 0.0
    %1129 = vmatprep.subr.mxu0 0.0
    %1130 = vmatpush1.msra.mxu0 0.0
    %1131 = vmatprep.subr.mxu0 0.0
    %1132 = vmatpush1.msra.mxu0 0.0
    %1133 = vmatprep.subr.mxu0 0.0
    %1134 = vmatpush1.msra.mxu0 0.0
    %1135 = vmatprep.subr.mxu0 0.0
    %1136 = vmatpush1.msra.mxu0 0.0
    %1137 = vmatprep.subr.mxu0 0.0
    %1138 = vmatpush1.msra.mxu0 0.0
    %1139 = vmatprep.subr.mxu0 0.0
    %1140 = vmatpush1.msra.mxu0 0.0
    %1141 = vmatprep.subr.mxu0 0.0
    %1142 = vmatpush1.msra.mxu0 0.0
    %1143 = vmatprep.subr.mxu0 0.0
    %1144 = vmatpush1.msra.mxu0 0.0
    %1145 = vmatprep.subr.mxu0 0.0
    %1146 = vmatpush1.msra.mxu0 0.0
    %1147 = vmatprep.subr.mxu0 0.0
    %1148 = vmatpush1.msra.mxu0 0.0
    %1149 = vmatprep.subr.mxu0 0.0
    %1150 = vmatpush1.msra.mxu0 0.0
    %1151 = vmatprep.subr.mxu0 0.0
    %1152 = vmatpush1.msra.mxu0 0.0
    %1153 = vmatprep.subr.mxu0 0.0
    %1154 = vmatpush1.msra.mxu0 0.0
    %1155 = vmatprep.subr.mxu0 0.0
    %1156 = vmatpush1.msra.mxu0 0.0
    %1157 = vmatprep.subr.mxu0 0.0
    %1158 = vmatpush1.msra.mxu0 0.0
    %1159 = vmatprep.subr.mxu0 0.0
    %1160 = vmatpush1.msra.mxu0 0.0
    %1161 = vmatprep.mubr.f32.mxu0 0.0
    %1162 = vmatmul.mubr.f32.gmra.mrb[0].mxu0 %v1095
    %v1163 = vpop.f32.mrb[0].mxu0
    %v1164 = vadd.f32 0.0, %v1163
    %v1165 = vpop.f32.mrb[0].mxu0
    %1166 = vdwg.mxu0
    %v1167 = vadd.f32 %v1094, %v1164
    %v1168 = vmul.f32 %v1167, 0.5
    %v1169 = vtanh.pop %v1168
    %v1170 = vmul.f32 %v1169, 0.5
    %v1171 = vadd.f32 %v1170, 0.5
    %v1172 = vtanh.pop %v1167
    %v1173 = vmul.f32 %v1171, %v982
    %1175 = vrot.lane.b32.xlu0 %v1172, 64
    %v1176 = vpop.permute.xlu0 %1175
    %v1178 = vmul.f32 %v1171, %v1176
    %1180 = vrot.lane.b32.xlu0 %v1178, 32
    %v1181 = vpop.permute.xlu0 %1180
    %v1183 = vadd.f32 %v1173, %v1181
    %v1184 = vtanh.pop %v1183
    %1186 = vrot.lane.b32.xlu0 %v1184, 64
    %v1187 = vpop.permute.xlu0 %1186
    %v1189 = vmul.f32 %v1171, %v1187
    %1191 = vrot.lane.b32.xlu0 %v1189, 32
    %v1192 = vpop.permute.xlu0 %1191
    %1195 = vrot.lane.b32.xlu0 %v1092, 64
    %v1196 = vpop.permute.xlu0 %1195
    %v1198 = vsel %vm85, %v1192, %v1196
    %v1200 = vsel %vm190, %v1198, 0
    %1202 = vmatprep.subr.mxu0 0.0
    %1203 = vmatpush1.msra.mxu0 %v69
    %1204 = vmatprep.subr.mxu0 0.0
    %1205 = vmatpush1.msra.mxu0 %v70
    %1206 = vmatprep.subr.mxu0 0.0
    %1207 = vmatpush1.msra.mxu0 %v71
    %1208 = vmatprep.subr.mxu0 0.0
    %1209 = vmatpush1.msra.mxu0 %v72
    %1210 = vmatprep.subr.mxu0 0.0
    %1211 = vmatpush1.msra.mxu0 %v73
    %1212 = vmatprep.subr.mxu0 0.0
    %1213 = vmatpush1.msra.mxu0 %v74
    %1214 = vmatprep.subr.mxu0 0.0
    %1215 = vmatpush1.msra.mxu0 %v75
    %1216 = vmatprep.subr.mxu0 0.0
    %1217 = vmatpush1.msra.mxu0 %v76
    %1218 = vmatprep.subr.mxu0 0.0
    %1219 = vmatpush1.msra.mxu0 0.0
    %1220 = vmatprep.subr.mxu0 0.0
    %1221 = vmatpush1.msra.mxu0 0.0
    %1222 = vmatprep.subr.mxu0 0.0
    %1223 = vmatpush1.msra.mxu0 0.0
    %1224 = vmatprep.subr.mxu0 0.0
    %1225 = vmatpush1.msra.mxu0 0.0
    %1226 = vmatprep.subr.mxu0 0.0
    %1227 = vmatpush1.msra.mxu0 0.0
    %1228 = vmatprep.subr.mxu0 0.0
    %1229 = vmatpush1.msra.mxu0 0.0
    %1230 = vmatprep.subr.mxu0 0.0
    %1231 = vmatpush1.msra.mxu0 0.0
    %1232 = vmatprep.subr.mxu0 0.0
    %1233 = vmatpush1.msra.mxu0 0.0
    %1234 = vmatprep.subr.mxu0 0.0
    %1235 = vmatpush1.msra.mxu0 0.0
    %1236 = vmatprep.subr.mxu0 0.0
    %1237 = vmatpush1.msra.mxu0 0.0
    %1238 = vmatprep.subr.mxu0 0.0
    %1239 = vmatpush1.msra.mxu0 0.0
    %1240 = vmatprep.subr.mxu0 0.0
    %1241 = vmatpush1.msra.mxu0 0.0
    %1242 = vmatprep.subr.mxu0 0.0
    %1243 = vmatpush1.msra.mxu0 0.0
    %1244 = vmatprep.subr.mxu0 0.0
    %1245 = vmatpush1.msra.mxu0 0.0
    %1246 = vmatprep.subr.mxu0 0.0
    %1247 = vmatpush1.msra.mxu0 0.0
    %1248 = vmatprep.subr.mxu0 0.0
    %1249 = vmatpush1.msra.mxu0 0.0
    %1250 = vmatprep.subr.mxu0 0.0
    %1251 = vmatpush1.msra.mxu0 0.0
    %1252 = vmatprep.subr.mxu0 0.0
    %1253 = vmatpush1.msra.mxu0 0.0
    %1254 = vmatprep.subr.mxu0 0.0
    %1255 = vmatpush1.msra.mxu0 0.0
    %1256 = vmatprep.subr.mxu0 0.0
    %1257 = vmatpush1.msra.mxu0 0.0
    %1258 = vmatprep.subr.mxu0 0.0
    %1259 = vmatpush1.msra.mxu0 0.0
    %1260 = vmatprep.subr.mxu0 0.0
    %1261 = vmatpush1.msra.mxu0 0.0
    %1262 = vmatprep.subr.mxu0 0.0
    %1263 = vmatpush1.msra.mxu0 0.0
    %1264 = vmatprep.subr.mxu0 0.0
    %1265 = vmatpush1.msra.mxu0 0.0
    %1266 = vmatprep.mubr.f32.mxu0 0.0
    %1267 = vmatmul.mubr.f32.gmra.mrb[0].mxu0 %v1200
    %v1268 = vpop.f32.mrb[0].mxu0
    %v1269 = vadd.f32 %v82, %v1268
    %v1270 = vpop.f32.mrb[0].mxu0
    %1271 = vdwg.mxu0
    %v1272 = vmul.f32 %v1269, 0.5
    %v1273 = vtanh.pop %v1272
    %v1274 = vmul.f32 %v1273, 0.5
    %v1275 = vadd.f32 %v1274, 0.5
    %v1276 = vtanh.pop %v1269
    %v1277 = vmul.f32 %v1275, %v1086
    %1279 = vrot.lane.b32.xlu0 %v1276, 64
    %v1280 = vpop.permute.xlu0 %1279
    %v1282 = vmul.f32 %v1275, %v1280
    %1284 = vrot.lane.b32.xlu0 %v1282, 32
    %v1285 = vpop.permute.xlu0 %1284
    %v1287 = vadd.f32 %v1277, %v1285
    %v1288 = vtanh.pop %v1287
    %1290 = vrot.lane.b32.xlu0 %v1288, 64
    %v1291 = vpop.permute.xlu0 %1290
    %v1293 = vmul.f32 %v1275, %v1291
    %s1294 = scalar_lea.vmem [#allocation2], 48
    %v1295 = vld [vmem:[%s1294] sm:$0xff]
    %v1296 = vsel %vm85, %v1192, 0
    %1298 = vmatprep.subr.mxu0 0.0
    %1299 = vmatpush1.msra.mxu0 %v65
    %1300 = vmatprep.subr.mxu0 0.0
    %1301 = vmatpush1.msra.mxu0 %v66
    %1302 = vmatprep.subr.mxu0 0.0
    %1303 = vmatpush1.msra.mxu0 %v67
    %1304 = vmatprep.subr.mxu0 0.0
    %1305 = vmatpush1.msra.mxu0 %v68
    %1306 = vmatprep.subr.mxu0 0.0
    %1307 = vmatpush1.msra.mxu0 0.0
    %1308 = vmatprep.subr.mxu0 0.0
    %1309 = vmatpush1.msra.mxu0 0.0
    %1310 = vmatprep.subr.mxu0 0.0
    %1311 = vmatpush1.msra.mxu0 0.0
    %1312 = vmatprep.subr.mxu0 0.0
    %1313 = vmatpush1.msra.mxu0 0.0
    %1314 = vmatprep.subr.mxu0 0.0
    %1315 = vmatpush1.msra.mxu0 0.0
    %1316 = vmatprep.subr.mxu0 0.0
    %1317 = vmatpush1.msra.mxu0 0.0
    %1318 = vmatprep.subr.mxu0 0.0
    %1319 = vmatpush1.msra.mxu0 0.0
    %1320 = vmatprep.subr.mxu0 0.0
    %1321 = vmatpush1.msra.mxu0 0.0
    %1322 = vmatprep.subr.mxu0 0.0
    %1323 = vmatpush1.msra.mxu0 0.0
    %1324 = vmatprep.subr.mxu0 0.0
    %1325 = vmatpush1.msra.mxu0 0.0
    %1326 = vmatprep.subr.mxu0 0.0
    %1327 = vmatpush1.msra.mxu0 0.0
    %1328 = vmatprep.subr.mxu0 0.0
    %1329 = vmatpush1.msra.mxu0 0.0
    %1330 = vmatprep.subr.mxu0 0.0
    %1331 = vmatpush1.msra.mxu0 0.0
    %1332 = vmatprep.subr.mxu0 0.0
    %1333 = vmatpush1.msra.mxu0 0.0
    %1334 = vmatprep.subr.mxu0 0.0
    %1335 = vmatpush1.msra.mxu0 0.0
    %1336 = vmatprep.subr.mxu0 0.0
    %1337 = vmatpush1.msra.mxu0 0.0
    %1338 = vmatprep.subr.mxu0 0.0
    %1339 = vmatpush1.msra.mxu0 0.0
    %1340 = vmatprep.subr.mxu0 0.0
    %1341 = vmatpush1.msra.mxu0 0.0
    %1342 = vmatprep.subr.mxu0 0.0
    %1343 = vmatpush1.msra.mxu0 0.0
    %1344 = vmatprep.subr.mxu0 0.0
    %1345 = vmatpush1.msra.mxu0 0.0
    %1346 = vmatprep.subr.mxu0 0.0
    %1347 = vmatpush1.msra.mxu0 0.0
    %1348 = vmatprep.subr.mxu0 0.0
    %1349 = vmatpush1.msra.mxu0 0.0
    %1350 = vmatprep.subr.mxu0 0.0
    %1351 = vmatpush1.msra.mxu0 0.0
    %1352 = vmatprep.subr.mxu0 0.0
    %1353 = vmatpush1.msra.mxu0 0.0
    %1354 = vmatprep.subr.mxu0 0.0
    %1355 = vmatpush1.msra.mxu0 0.0
    %1356 = vmatprep.subr.mxu0 0.0
    %1357 = vmatpush1.msra.mxu0 0.0
    %1358 = vmatprep.subr.mxu0 0.0
    %1359 = vmatpush1.msra.mxu0 0.0
    %1360 = vmatprep.subr.mxu0 0.0
    %1361 = vmatpush1.msra.mxu0 0.0
    %1362 = vmatprep.mubr.f32.mxu0 0.0
    %1363 = vmatmul.mubr.f32.gmra.mrb[0].mxu0 %v1296
    %v1364 = vpop.f32.mrb[0].mxu0
    %v1365 = vadd.f32 0.0, %v1364
    %v1366 = vpop.f32.mrb[0].mxu0
    %1367 = vdwg.mxu0
    %v1368 = vadd.f32 %v1295, %v1365
    %v1369 = vmul.f32 %v1368, 0.5
    %v1370 = vtanh.pop %v1369
    %v1371 = vmul.f32 %v1370, 0.5
    %v1372 = vadd.f32 %v1371, 0.5
    %v1373 = vtanh.pop %v1368
    %v1374 = vmul.f32 %v1372, %v1183
    %1376 = vrot.lane.b32.xlu0 %v1373, 64
    %v1377 = vpop.permute.xlu0 %1376
    %v1379 = vmul.f32 %v1372, %v1377
    %1381 = vrot.lane.b32.xlu0 %v1379, 32
    %v1382 = vpop.permute.xlu0 %1381
    %v1384 = vadd.f32 %v1374, %v1382
    %v1385 = vtanh.pop %v1384
    %1387 = vrot.lane.b32.xlu0 %v1385, 64
    %v1388 = vpop.permute.xlu0 %1387
    %v1390 = vmul.f32 %v1372, %v1388
    %1392 = vrot.lane.b32.xlu0 %v1390, 32
    %v1393 = vpop.permute.xlu0 %1392
    %1396 = vrot.lane.b32.xlu0 %v1293, 64
    %v1397 = vpop.permute.xlu0 %1396
    %v1399 = vsel %vm85, %v1393, %v1397
    %v1401 = vsel %vm190, %v1399, 0
    %1403 = vmatprep.subr.mxu0 0.0
    %1404 = vmatpush1.msra.mxu0 %v69
    %1405 = vmatprep.subr.mxu0 0.0
    %1406 = vmatpush1.msra.mxu0 %v70
    %1407 = vmatprep.subr.mxu0 0.0
    %1408 = vmatpush1.msra.mxu0 %v71
    %1409 = vmatprep.subr.mxu0 0.0
    %1410 = vmatpush1.msra.mxu0 %v72
    %1411 = vmatprep.subr.mxu0 0.0
    %1412 = vmatpush1.msra.mxu0 %v73
    %1413 = vmatprep.subr.mxu0 0.0
    %1414 = vmatpush1.msra.mxu0 %v74
    %1415 = vmatprep.subr.mxu0 0.0
    %1416 = vmatpush1.msra.mxu0 %v75
    %1417 = vmatprep.subr.mxu0 0.0
    %1418 = vmatpush1.msra.mxu0 %v76
    %1419 = vmatprep.subr.mxu0 0.0
    %1420 = vmatpush1.msra.mxu0 0.0
    %1421 = vmatprep.subr.mxu0 0.0
    %1422 = vmatpush1.msra.mxu0 0.0
    %1423 = vmatprep.subr.mxu0 0.0
    %1424 = vmatpush1.msra.mxu0 0.0
    %1425 = vmatprep.subr.mxu0 0.0
    %1426 = vmatpush1.msra.mxu0 0.0
    %1427 = vmatprep.subr.mxu0 0.0
    %1428 = vmatpush1.msra.mxu0 0.0
    %1429 = vmatprep.subr.mxu0 0.0
    %1430 = vmatpush1.msra.mxu0 0.0
    %1431 = vmatprep.subr.mxu0 0.0
    %1432 = vmatpush1.msra.mxu0 0.0
    %1433 = vmatprep.subr.mxu0 0.0
    %1434 = vmatpush1.msra.mxu0 0.0
    %1435 = vmatprep.subr.mxu0 0.0
    %1436 = vmatpush1.msra.mxu0 0.0
    %1437 = vmatprep.subr.mxu0 0.0
    %1438 = vmatpush1.msra.mxu0 0.0
    %1439 = vmatprep.subr.mxu0 0.0
    %1440 = vmatpush1.msra.mxu0 0.0
    %1441 = vmatprep.subr.mxu0 0.0
    %1442 = vmatpush1.msra.mxu0 0.0
    %1443 = vmatprep.subr.mxu0 0.0
    %1444 = vmatpush1.msra.mxu0 0.0
    %1445 = vmatprep.subr.mxu0 0.0
    %1446 = vmatpush1.msra.mxu0 0.0
    %1447 = vmatprep.subr.mxu0 0.0
    %1448 = vmatpush1.msra.mxu0 0.0
    %1449 = vmatprep.subr.mxu0 0.0
    %1450 = vmatpush1.msra.mxu0 0.0
    %1451 = vmatprep.subr.mxu0 0.0
    %1452 = vmatpush1.msra.mxu0 0.0
    %1453 = vmatprep.subr.mxu0 0.0
    %1454 = vmatpush1.msra.mxu0 0.0
    %1455 = vmatprep.subr.mxu0 0.0
    %1456 = vmatpush1.msra.mxu0 0.0
    %1457 = vmatprep.subr.mxu0 0.0
    %1458 = vmatpush1.msra.mxu0 0.0
    %1459 = vmatprep.subr.mxu0 0.0
    %1460 = vmatpush1.msra.mxu0 0.0
    %1461 = vmatprep.subr.mxu0 0.0
    %1462 = vmatpush1.msra.mxu0 0.0
    %1463 = vmatprep.subr.mxu0 0.0
    %1464 = vmatpush1.msra.mxu0 0.0
    %1465 = vmatprep.subr.mxu0 0.0
    %1466 = vmatpush1.msra.mxu0 0.0
    %1467 = vmatprep.mubr.f32.mxu0 0.0
    %1468 = vmatmul.mubr.f32.gmra.mrb[0].mxu0 %v1401
    %v1469 = vpop.f32.mrb[0].mxu0
    %v1470 = vadd.f32 %v82, %v1469
    %v1471 = vpop.f32.mrb[0].mxu0
    %1472 = vdwg.mxu0
    %v1473 = vmul.f32 %v1470, 0.5
    %v1474 = vtanh.pop %v1473
    %v1475 = vmul.f32 %v1474, 0.5
    %v1476 = vadd.f32 %v1475, 0.5
    %v1477 = vtanh.pop %v1470
    %v1478 = vmul.f32 %v1476, %v1287
    %1480 = vrot.lane.b32.xlu0 %v1477, 64
    %v1481 = vpop.permute.xlu0 %1480
    %v1483 = vmul.f32 %v1476, %v1481
    %1485 = vrot.lane.b32.xlu0 %v1483, 32
    %v1486 = vpop.permute.xlu0 %1485
    %v1488 = vadd.f32 %v1478, %v1486
    %v1489 = vtanh.pop %v1488
    %1491 = vrot.lane.b32.xlu0 %v1489, 64
    %v1492 = vpop.permute.xlu0 %1491
    %v1494 = vmul.f32 %v1476, %v1492
    %s1495 = scalar_lea.vmem [#allocation2], 56
    %v1496 = vld [vmem:[%s1495] sm:$0xff]
    %v1497 = vsel %vm85, %v1393, 0
    %1499 = vmatprep.subr.mxu0 0.0
    %1500 = vmatpush1.msra.mxu0 %v65
    %1501 = vmatprep.subr.mxu0 0.0
    %1502 = vmatpush1.msra.mxu0 %v66
    %1503 = vmatprep.subr.mxu0 0.0
    %1504 = vmatpush1.msra.mxu0 %v67
    %1505 = vmatprep.subr.mxu0 0.0
    %1506 = vmatpush1.msra.mxu0 %v68
    %1507 = vmatprep.subr.mxu0 0.0
    %1508 = vmatpush1.msra.mxu0 0.0
    %1509 = vmatprep.subr.mxu0 0.0
    %1510 = vmatpush1.msra.mxu0 0.0
    %1511 = vmatprep.subr.mxu0 0.0
    %1512 = vmatpush1.msra.mxu0 0.0
    %1513 = vmatprep.subr.mxu0 0.0
    %1514 = vmatpush1.msra.mxu0 0.0
    %1515 = vmatprep.subr.mxu0 0.0
    %1516 = vmatpush1.msra.mxu0 0.0
    %1517 = vmatprep.subr.mxu0 0.0
    %1518 = vmatpush1.msra.mxu0 0.0
    %1519 = vmatprep.subr.mxu0 0.0
    %1520 = vmatpush1.msra.mxu0 0.0
    %1521 = vmatprep.subr.mxu0 0.0
    %1522 = vmatpush1.msra.mxu0 0.0
    %1523 = vmatprep.subr.mxu0 0.0
    %1524 = vmatpush1.msra.mxu0 0.0
    %1525 = vmatprep.subr.mxu0 0.0
    %1526 = vmatpush1.msra.mxu0 0.0
    %1527 = vmatprep.subr.mxu0 0.0
    %1528 = vmatpush1.msra.mxu0 0.0
    %1529 = vmatprep.subr.mxu0 0.0
    %1530 = vmatpush1.msra.mxu0 0.0
    %1531 = vmatprep.subr.mxu0 0.0
    %1532 = vmatpush1.msra.mxu0 0.0
    %1533 = vmatprep.subr.mxu0 0.0
    %1534 = vmatpush1.msra.mxu0 0.0
    %1535 = vmatprep.subr.mxu0 0.0
    %1536 = vmatpush1.msra.mxu0 0.0
    %1537 = vmatprep.subr.mxu0 0.0
    %1538 = vmatpush1.msra.mxu0 0.0
    %1539 = vmatprep.subr.mxu0 0.0
    %1540 = vmatpush1.msra.mxu0 0.0
    %1541 = vmatprep.subr.mxu0 0.0
    %1542 = vmatpush1.msra.mxu0 0.0
    %1543 = vmatprep.subr.mxu0 0.0
    %1544 = vmatpush1.msra.mxu0 0.0
    %1545 = vmatprep.subr.mxu0 0.0
    %1546 = vmatpush1.msra.mxu0 0.0
    %1547 = vmatprep.subr.mxu0 0.0
    %1548 = vmatpush1.msra.mxu0 0.0
    %1549 = vmatprep.subr.mxu0 0.0
    %1550 = vmatpush1.msra.mxu0 0.0
    %1551 = vmatprep.subr.mxu0 0.0
    %1552 = vmatpush1.msra.mxu0 0.0
    %1553 = vmatprep.subr.mxu0 0.0
    %1554 = vmatpush1.msra.mxu0 0.0
    %1555 = vmatprep.subr.mxu0 0.0
    %1556 = vmatpush1.msra.mxu0 0.0
    %1557 = vmatprep.subr.mxu0 0.0
    %1558 = vmatpush1.msra.mxu0 0.0
    %1559 = vmatprep.subr.mxu0 0.0
    %1560 = vmatpush1.msra.mxu0 0.0
    %1561 = vmatprep.subr.mxu0 0.0
    %1562 = vmatpush1.msra.mxu0 0.0
    %1563 = vmatprep.mubr.f32.mxu0 0.0
    %1564 = vmatmul.mubr.f32.gmra.mrb[0].mxu0 %v1497
    %v1565 = vpop.f32.mrb[0].mxu0
    %v1566 = vadd.f32 0.0, %v1565
    %v1567 = vpop.f32.mrb[0].mxu0
    %1568 = vdwg.mxu0
    %v1569 = vadd.f32 %v1496, %v1566
    %v1570 = vmul.f32 %v1569, 0.5
    %v1571 = vtanh.pop %v1570
    %v1572 = vmul.f32 %v1571, 0.5
    %v1573 = vadd.f32 %v1572, 0.5
    %v1574 = vtanh.pop %v1569
    %v1575 = vmul.f32 %v1573, %v1384
    %1577 = vrot.lane.b32.xlu0 %v1574, 64
    %v1578 = vpop.permute.xlu0 %1577
    %v1580 = vmul.f32 %v1573, %v1578
    %1582 = vrot.lane.b32.xlu0 %v1580, 32
    %v1583 = vpop.permute.xlu0 %1582
    %v1585 = vadd.f32 %v1575, %v1583
    %v1586 = vtanh.pop %v1585
    %1588 = vrot.lane.b32.xlu0 %v1586, 64
    %v1589 = vpop.permute.xlu0 %1588
    %v1591 = vmul.f32 %v1573, %v1589
    %1593 = vrot.lane.b32.xlu0 %v1591, 32
    %v1594 = vpop.permute.xlu0 %1593
    %1597 = vrot.lane.b32.xlu0 %v1494, 64
    %v1598 = vpop.permute.xlu0 %1597
    %v1600 = vsel %vm85, %v1594, %v1598
    %v1602 = vsel %vm190, %v1600, 0
    %1604 = vmatprep.subr.mxu0 0.0
    %1605 = vmatpush1.msra.mxu0 %v69
    %1606 = vmatprep.subr.mxu0 0.0
    %1607 = vmatpush1.msra.mxu0 %v70
    %1608 = vmatprep.subr.mxu0 0.0
    %1609 = vmatpush1.msra.mxu0 %v71
    %1610 = vmatprep.subr.mxu0 0.0
    %1611 = vmatpush1.msra.mxu0 %v72
    %1612 = vmatprep.subr.mxu0 0.0
    %1613 = vmatpush1.msra.mxu0 %v73
    %1614 = vmatprep.subr.mxu0 0.0
    %1615 = vmatpush1.msra.mxu0 %v74
    %1616 = vmatprep.subr.mxu0 0.0
    %1617 = vmatpush1.msra.mxu0 %v75
    %1618 = vmatprep.subr.mxu0 0.0
    %1619 = vmatpush1.msra.mxu0 %v76
    %1620 = vmatprep.subr.mxu0 0.0
    %1621 = vmatpush1.msra.mxu0 0.0
    %1622 = vmatprep.subr.mxu0 0.0
    %1623 = vmatpush1.msra.mxu0 0.0
    %1624 = vmatprep.subr.mxu0 0.0
    %1625 = vmatpush1.msra.mxu0 0.0
    %1626 = vmatprep.subr.mxu0 0.0
    %1627 = vmatpush1.msra.mxu0 0.0
    %1628 = vmatprep.subr.mxu0 0.0
    %1629 = vmatpush1.msra.mxu0 0.0
    %1630 = vmatprep.subr.mxu0 0.0
    %1631 = vmatpush1.msra.mxu0 0.0
    %1632 = vmatprep.subr.mxu0 0.0
    %1633 = vmatpush1.msra.mxu0 0.0
    %1634 = vmatprep.subr.mxu0 0.0
    %1635 = vmatpush1.msra.mxu0 0.0
    %1636 = vmatprep.subr.mxu0 0.0
    %1637 = vmatpush1.msra.mxu0 0.0
    %1638 = vmatprep.subr.mxu0 0.0
    %1639 = vmatpush1.msra.mxu0 0.0
    %1640 = vmatprep.subr.mxu0 0.0
    %1641 = vmatpush1.msra.mxu0 0.0
    %1642 = vmatprep.subr.mxu0 0.0
    %1643 = vmatpush1.msra.mxu0 0.0
    %1644 = vmatprep.subr.mxu0 0.0
    %1645 = vmatpush1.msra.mxu0 0.0
    %1646 = vmatprep.subr.mxu0 0.0
    %1647 = vmatpush1.msra.mxu0 0.0
    %1648 = vmatprep.subr.mxu0 0.0
    %1649 = vmatpush1.msra.mxu0 0.0
    %1650 = vmatprep.subr.mxu0 0.0
    %1651 = vmatpush1.msra.mxu0 0.0
    %1652 = vmatprep.subr.mxu0 0.0
    %1653 = vmatpush1.msra.mxu0 0.0
    %1654 = vmatprep.subr.mxu0 0.0
    %1655 = vmatpush1.msra.mxu0 0.0
    %1656 = vmatprep.subr.mxu0 0.0
    %1657 = vmatpush1.msra.mxu0 0.0
    %1658 = vmatprep.subr.mxu0 0.0
    %1659 = vmatpush1.msra.mxu0 0.0
    %1660 = vmatprep.subr.mxu0 0.0
    %1661 = vmatpush1.msra.mxu0 0.0
    %1662 = vmatprep.subr.mxu0 0.0
    %1663 = vmatpush1.msra.mxu0 0.0
    %1664 = vmatprep.subr.mxu0 0.0
    %1665 = vmatpush1.msra.mxu0 0.0
    %1666 = vmatprep.subr.mxu0 0.0
    %1667 = vmatpush1.msra.mxu0 0.0
    %1668 = vmatprep.mubr.f32.mxu0 0.0
    %1669 = vmatmul.mubr.f32.gmra.mrb[0].mxu0 %v1602
    %v1670 = vpop.f32.mrb[0].mxu0
    %v1671 = vadd.f32 %v82, %v1670
    %v1672 = vpop.f32.mrb[0].mxu0
    %1673 = vdwg.mxu0
    %v1674 = vmul.f32 %v1671, 0.5
    %v1675 = vtanh.pop %v1674
    %v1676 = vmul.f32 %v1675, 0.5
    %v1677 = vadd.f32 %v1676, 0.5
    %v1678 = vtanh.pop %v1671
    %v1679 = vmul.f32 %v1677, %v1488
    %1681 = vrot.lane.b32.xlu0 %v1678, 64
    %v1682 = vpop.permute.xlu0 %1681
    %v1684 = vmul.f32 %v1677, %v1682
    %1686 = vrot.lane.b32.xlu0 %v1684, 32
    %v1687 = vpop.permute.xlu0 %1686
    %v1689 = vadd.f32 %v1679, %v1687
    %v1690 = vtanh.pop %v1689
    %1692 = vrot.lane.b32.xlu0 %v1690, 64
    %v1693 = vpop.permute.xlu0 %1692
    %v1695 = vmul.f32 %v1677, %v1693
    %1697 = vrot.lane.b32.xlu0 %v1695, 64
    %v1698 = vpop.permute.xlu0 %1697
    %1701 = vrot.lane.b32.xlu0 %v1585, 32
    %v1702 = vpop.permute.xlu0 %1701
    %1705 = vrot.lane.b32.xlu0 %v1689, 64
    %v1706 = vpop.permute.xlu0 %1705
    %v1708 = vsel %vm85, %v1594, %v1698
    %v1709 = vsel %vm190, %v1708, %v1702
    %vm1710 = vcmask 785408
    %v1711 = vsel %vm1710, %v1709, %v1706
    %1712 = vst [vmem:[#allocation8] sm:$0xff] %v1711
    // Predicated region
    $region34: #{tpu_custom_call.1} parent=1 // pred_check
      _
    $region35: #{tpu_custom_call.1} parent=1 // pred_check_branch
      %1714 = sbr.rel (0) target = $region37
    $region36: #{tpu_custom_call.1} parent=1 // pred_region
      %s1716 = ssub.s32 128, 128
      %1717 = vsyncadd [#allocation4], %s1716
      %s1719 = sshll.u32 [#allocation8], 4
      %s1720 = int_to_ptr.vmem [resolvable:$true] %s1719
      %1722 = dma.vmem_to_hbm [thread:$0]  %s1720, 128, %s4, [#allocation4]
    $region37: #{tpu_custom_call.1} parent=1 // pred_fallthru
      _
    // Predicated region
    $region38: #{tpu_custom_call.1} parent=1 // pred_check
      _
    $region39: #{tpu_custom_call.1} parent=1 // pred_check_branch
      %1724 = sbr.rel (0) target = $region41
    $region40: #{tpu_custom_call.1} parent=1 // pred_region
      %1725 = dma.done [#allocation4], 128
    $region41: #{tpu_custom_call.1} parent=1 // pred_fallthru
      _
    %1726 = vsyncpa [#allocation3], 1
    %1727 = vsyncpa [#allocation6], 1
    %1728 = vsyncpa [#allocation4], 1

</llo_original>
